<compile_context>
chip_gen: v5e
topology: v5e:2x2
jax: 0.10.0
libtpu: 0.0.40
codegen_flags: <defaults>
</compile_context>

<pallas_src>
import jax
import jax.numpy as jnp
from jax.experimental import pallas as pl
from jax.experimental.pallas import tpu as pltpu

BN_EPS = 1e-5
LEAKY_SLOPE = 0.2          # PyG GATConv default negative_slope
NEG_INF = -1e30


# ----------------------------------------------------------------------------
# helpers traced into the kernel body
# ----------------------------------------------------------------------------
def _dot(a, b):
    return jnp.dot(a, b, preferred_element_type=jnp.float32)


def _bn_train(x, gamma, beta):
    """BatchNorm1d, training mode: batch mean / biased variance."""
    mean = jnp.mean(x, axis=0, keepdims=True)
    var = jnp.mean((x - mean) ** 2, axis=0, keepdims=True)
    return (x - mean) * jax.lax.rsqrt(var + BN_EPS) * gamma + beta


def _log_softmax_last(x):
    m = jnp.max(x, axis=-1, keepdims=True)
    s = x - m
    return s - jnp.log(jnp.sum(jnp.exp(s), axis=-1, keepdims=True))


# ----------------------------------------------------------------------------
# single fused kernel: whole GATNet forward
# ----------------------------------------------------------------------------
def gatnet_kernel(x_ref, adj_ref, pool_ref, vec_ref,
                  wfeat_ref, convw_ref, wsrcT_ref, headw_ref,
                  out_ref):
    L = convw_ref.shape[0]            # num conv layers
    H = wfeat_ref.shape[1]            # hidden
    heads = wsrcT_ref.shape[1]
    chead = H // heads
    F = x_ref.shape[1]                # num node features
    C = out_ref.shape[1]              # num classes

    adj = adj_ref[...]                # [N, N] 0/1 mask, self loops included
    edge = adj > 0.5

    def vrow(i):                      # packed small-vector row -> [1, H]
        return vec_ref[i:i + 1, :]

    # ---- bn_feat -> relu(conv_feat)  (gfn conv == plain x @ W, no bias) -----
    x = _bn_train(x_ref[...], vrow(0)[:, :F], vrow(1)[:, :F])
    x = jnp.maximum(_dot(x, wfeat_ref[...]), 0.0)              # [N, H]

    # ---- GAT conv stack: x = relu(GATConv(BN(x))) ----------------------------
    for l in range(L):
        h_in = _bn_train(x, vrow(2 + l), vrow(2 + L + l))
        # fused projection: [xp | a_dst] = h_in @ [W | W @ att_dst]
        xpd = _dot(h_in, convw_ref[l])                         # [N, H + heads]
        xp = xpd[:, :H]                                        # [N, H]
        a_dst = xpd[:, H:H + heads]                            # [N, heads]
        # source coefficients, produced already transposed: [heads, N]
        #   a_srcT[h, j] = sum_k (W @ att_src)[k, h] * h_in[j, k]
        a_srcT = jax.lax.dot_general(
            wsrcT_ref[l], h_in,
            dimension_numbers=(((1,), (1,)), ((), ())),
            preferred_element_type=jnp.float32)

        head_outs = []
        for hh in range(heads):
            # e[i, j] = a_dst[i] + a_src[j]   (pure VPU broadcast add)
            e = a_dst[:, hh:hh + 1] + a_srcT[hh:hh + 1, :]     # [N, N]
            e = jnp.where(e > 0, e, LEAKY_SLOPE * e)           # LeakyReLU(0.2)
            logits = jnp.where(edge, e, NEG_INF)               # mask non-edges
            m = jnp.max(logits, axis=-1, keepdims=True)
            w = jnp.exp(logits - m)
            inv = pl.reciprocal(jnp.sum(w, axis=-1, keepdims=True), approx=True)
            attn = w * inv                                     # softmax over sources
            head_outs.append(
                _dot(attn, xp[:, hh * chead:(hh + 1) * chead]))  # [N, chead]
        bias = vrow(2 + 2 * L + l)
        x = jnp.maximum(jnp.concatenate(head_outs, axis=-1) + bias, 0.0)

    # ---- global_add_pool -----------------------------------------------------
    xg = _dot(pool_ref[...], x)                                # [G, H]

    # ---- fc block (num_fc_layers - 1 == 1 layer) -----------------------------
    headw = headw_ref[...]                                     # [H, H + C]
    xg = _bn_train(xg, vrow(2 + 3 * L), vrow(2 + 3 * L + 1))
    xg = jnp.maximum(_dot(xg, headw[:, :H]) + vrow(2 + 3 * L + 2), 0.0)

    # ---- bn_hidden -> lin_class -> log_softmax -------------------------------
    xg = _bn_train(xg, vrow(2 + 3 * L + 3), vrow(2 + 3 * L + 4))
    logits = _dot(xg, headw[:, H:H + C]) + vrow(2 + 3 * L + 5)[:, :C]
    out_ref[...] = _log_softmax_last(logits)


# ----------------------------------------------------------------------------
# wrapper: one pallas_call, everything VMEM-resident (shapes are tiny)
# ----------------------------------------------------------------------------
def gatnet_forward(p, x, adj, pool_mat):
    num_graphs = pool_mat.shape[0]
    num_classes = p['head_W'].shape[1] - p['head_W'].shape[0]
    args = (x, adj, pool_mat, p['vec'], p['W_feat'],
            p['conv_Wext'], p['conv_WsrcT'], p['head_W'])
    vmem = pl.BlockSpec(memory_space=pltpu.MemorySpace.VMEM)
    return pl.pallas_call(
        gatnet_kernel,
        out_shape=jax.ShapeDtypeStruct((num_graphs, num_classes), jnp.float32),
        in_specs=[vmem] * len(args),
        out_specs=vmem,
    )(*args)


# ----------------------------------------------------------------------------
# parameters (deterministic synthetic init; BN weight=1, bias=1e-4 per module)
# ----------------------------------------------------------------------------
def init_params(key, num_features, hidden, num_classes, num_conv_layers, heads):
    chead = hidden // heads
    L = num_conv_layers
    keys = iter(jax.random.split(key, 32))

    def dense(fan_in, shape):
        return jax.random.normal(next(keys), shape, jnp.float32) / jnp.sqrt(
            jnp.float32(fan_in))

    def pack_att(att):  # [heads, chead] -> block matrix [hidden, heads]
        m = jnp.zeros((hidden, heads), jnp.float32)
        for h in range(heads):
            m = m.at[h * chead:(h + 1) * chead, h].set(att[h])
        return m

    p = {}
    p['W_feat'] = dense(num_features, (num_features, hidden))

    wext_l, wsrcT_l = [], []
    for _ in range(L):
        W = dense(hidden, (hidden, hidden))
        att_src = dense(chead, (heads, chead))
        att_dst = dense(chead, (heads, chead))
        # fold attention projections into the layer weight (host-side, free)
        wext_l.append(jnp.concatenate([W, W @ pack_att(att_dst)], axis=1))
        wsrcT_l.append((W @ pack_att(att_src)).T)              # [heads, H]
    p['conv_Wext'] = jnp.stack(wext_l)                         # [L, H, H+heads]
    p['conv_WsrcT'] = jnp.stack(wsrcT_l)                       # [L, heads, H]

    fc_W = dense(hidden, (hidden, hidden))
    fc_b = dense(hidden, (hidden,))
    cls_W = dense(hidden, (hidden, num_classes))
    cls_b = dense(hidden, (num_classes,))
    p['head_W'] = jnp.concatenate([fc_W, cls_W], axis=1)       # [H, H+C]

    # packed small vectors: [2 + 3L + 6, H]
    #   rows: 0 bn_feat_g | 1 bn_feat_b | 2..2+L-1 conv_bn_g | 2+L.. conv_bn_b
    #         2+2L.. conv_bias | then fc_bn_g, fc_bn_b, fc_b, bnh_g, bnh_b, cls_b
    nrows = 2 + 3 * L + 6
    vec = jnp.zeros((nrows, hidden), jnp.float32)
    vec = vec.at[0, :num_features].set(1.0)                    # bn_feat gamma
    vec = vec.at[1, :num_features].set(1e-4)                   # bn_feat beta
    for l in range(L):
        vec = vec.at[2 + l, :].set(1.0)                        # conv BN gamma
        vec = vec.at[2 + L + l, :].set(1e-4)                   # conv BN beta
        # conv GAT bias rows (2+2L+l) stay zero (PyG zeros init)
    vec = vec.at[2 + 3 * L, :].set(1.0)                        # fc BN gamma
    vec = vec.at[2 + 3 * L + 1, :].set(1e-4)                   # fc BN beta
    vec = vec.at[2 + 3 * L + 2, :].set(fc_b)                   # fc bias
    vec = vec.at[2 + 3 * L + 3, :].set(1.0)                    # bn_hidden gamma
    vec = vec.at[2 + 3 * L + 4, :].set(1e-4)                   # bn_hidden beta
    vec = vec.at[2 + 3 * L + 5, :num_classes].set(cls_b)       # cls bias
    p['vec'] = vec
    return p


# ----------------------------------------------------------------------------
if __name__ == "__main__":
    NUM_FEATURES, HIDDEN, NUM_CLASSES = 16, 32, 4
    HEADS, NUM_CONV_LAYERS, NUM_FC_LAYERS = 4, 3, 2   # module defaults
    NODES_PER_GRAPH, NUM_GRAPHS = 12, 2
    N = NUM_GRAPHS * NODES_PER_GRAPH

    # deterministic graph: bidirectional ring per graph component (no self loops)
    rows, cols = [], []
    for g in range(NUM_GRAPHS):
        off = g * NODES_PER_GRAPH
        for i in range(NODES_PER_GRAPH):
            j = (i + 1) % NODES_PER_GRAPH
            rows += [off + i, off + j]
            cols += [off + j, off + i]
    rows = jnp.array(rows, jnp.int32)    # edge sources
    cols = jnp.array(cols, jnp.int32)    # edge targets
    batch = jnp.repeat(jnp.arange(NUM_GRAPHS, dtype=jnp.int32), NODES_PER_GRAPH)

    R = jax.nn.one_hot(rows, N, dtype=jnp.float32)     # [E, N]
    Cm = jax.nn.one_hot(cols, N, dtype=jnp.float32)    # [E, N]
    A = Cm.T @ R                                       # A[tgt, src] = 1 iff edge src->tgt
    adj = jnp.minimum(A + jnp.eye(N, dtype=jnp.float32), 1.0)   # + self loops (GATConv)
    pool_mat = jax.nn.one_hot(batch, NUM_GRAPHS, dtype=jnp.float32).T   # [G, N]

    key = jax.random.PRNGKey(0)
    kx, kp = jax.random.split(key)
    x = jax.random.normal(kx, (N, NUM_FEATURES), jnp.float32)
    params = init_params(kp, NUM_FEATURES, HIDDEN, NUM_CLASSES,
                         NUM_CONV_LAYERS, HEADS)

    out = gatnet_forward(params, x, adj, pool_mat)
    out = jax.block_until_ready(out)
    assert out.shape == (NUM_GRAPHS, NUM_CLASSES)
    assert bool(jnp.all(jnp.isfinite(out)))
    # log_softmax rows should (approximately) sum to 1 in prob space
    assert bool(jnp.all(jnp.abs(jnp.sum(jnp.exp(out), axis=-1) - 1.0) < 1e-3))
    print("KERNEL_OK")
</pallas_src>

<mosaic_0001>
module attributes {stable_mosaic.version = 11 : i64} {
  func.func @gatnet_kernel(%arg0: memref<24x16xf32, #tpu.memory_space<vmem>>, %arg1: memref<24x24xf32, #tpu.memory_space<vmem>>, %arg2: memref<2x24xf32, #tpu.memory_space<vmem>>, %arg3: memref<17x32xf32, #tpu.memory_space<vmem>>, %arg4: memref<16x32xf32, #tpu.memory_space<vmem>>, %arg5: memref<3x32x36xf32, #tpu.memory_space<vmem>>, %arg6: memref<3x4x32xf32, #tpu.memory_space<vmem>>, %arg7: memref<32x36xf32, #tpu.memory_space<vmem>>, %arg8: memref<2x4xf32, #tpu.memory_space<vmem>>) attributes {dimension_semantics = [], scalar_prefetch = 0 : i64, scratch_operands = 0 : i64, tpu.core_type = #tpu.core_type<tc>} {
    %c0 = arith.constant 0 : index
    %c0_0 = arith.constant 0 : index
    %0 = vector.load %arg1[%c0, %c0_0] : memref<24x24xf32, #tpu.memory_space<vmem>>, vector<24x24xf32>
    %cst = arith.constant 5.000000e-01 : f32
    %1 = vector.broadcast %cst : f32 to vector<24x24xf32>
    %2 = arith.cmpf ogt, %0, %1 : vector<24x24xf32>
    %c0_1 = arith.constant 0 : index
    %c0_2 = arith.constant 0 : index
    %3 = vector.load %arg0[%c0_1, %c0_2] : memref<24x16xf32, #tpu.memory_space<vmem>>, vector<24x16xf32>
    %c0_3 = arith.constant 0 : index
    %c0_4 = arith.constant 0 : index
    %4 = vector.load %arg3[%c0_3, %c0_4] : memref<17x32xf32, #tpu.memory_space<vmem>>, vector<1x32xf32>
    %5 = vector.extract_strided_slice %4 {offsets = [0, 0], sizes = [1, 16], strides = [1, 1]} : vector<1x32xf32> to vector<1x16xf32>
    %c1 = arith.constant 1 : index
    %c0_5 = arith.constant 0 : index
    %6 = vector.load %arg3[%c1, %c0_5] : memref<17x32xf32, #tpu.memory_space<vmem>>, vector<1x32xf32>
    %7 = vector.extract_strided_slice %6 {offsets = [0, 0], sizes = [1, 16], strides = [1, 1]} : vector<1x32xf32> to vector<1x16xf32>
    %cst_6 = arith.constant dense<0.000000e+00> : vector<16xf32>
    %8 = vector.multi_reduction <add>, %3, %cst_6 [0] : vector<24x16xf32> to vector<16xf32>
    %9 = vector.shape_cast %8 : vector<16xf32> to vector<1x16xf32>
    %cst_7 = arith.constant 2.400000e+01 : f32
    %10 = vector.broadcast %cst_7 : f32 to vector<1x16xf32>
    %11 = arith.divf %9, %10 : vector<1x16xf32>
    %12 = vector.broadcast %11 : vector<1x16xf32> to vector<24x16xf32>
    %13 = arith.subf %3, %12 : vector<24x16xf32>
    %14 = arith.mulf %13, %13 : vector<24x16xf32>
    %cst_8 = arith.constant dense<0.000000e+00> : vector<16xf32>
    %15 = vector.multi_reduction <add>, %14, %cst_8 [0] : vector<24x16xf32> to vector<16xf32>
    %16 = vector.shape_cast %15 : vector<16xf32> to vector<1x16xf32>
    %cst_9 = arith.constant 2.400000e+01 : f32
    %17 = vector.broadcast %cst_9 : f32 to vector<1x16xf32>
    %18 = arith.divf %16, %17 : vector<1x16xf32>
    %19 = vector.broadcast %11 : vector<1x16xf32> to vector<24x16xf32>
    %20 = arith.subf %3, %19 : vector<24x16xf32>
    %cst_10 = arith.constant 9.99999974E-6 : f32
    %21 = vector.broadcast %cst_10 : f32 to vector<1x16xf32>
    %22 = arith.addf %18, %21 : vector<1x16xf32>
    %23 = math.rsqrt %22 : vector<1x16xf32>
    %24 = vector.broadcast %23 : vector<1x16xf32> to vector<24x16xf32>
    %25 = arith.mulf %20, %24 : vector<24x16xf32>
    %26 = vector.broadcast %5 : vector<1x16xf32> to vector<24x16xf32>
    %27 = arith.mulf %25, %26 : vector<24x16xf32>
    %28 = vector.broadcast %7 : vector<1x16xf32> to vector<24x16xf32>
    %29 = arith.addf %27, %28 : vector<24x16xf32>
    %c0_11 = arith.constant 0 : index
    %c0_12 = arith.constant 0 : index
    %30 = vector.load %arg4[%c0_11, %c0_12] : memref<16x32xf32, #tpu.memory_space<vmem>>, vector<16x32xf32>
    %cst_13 = arith.constant dense<0.000000e+00> : vector<24x32xf32>
    %31 = tpu.matmul %29, %30, %cst_13 {dimension_numbers = #tpu.dot_dimension_numbers<[1], [0], [0], [1], [0, 0, 1, 1], [], []>} : vector<24x16xf32>, vector<16x32xf32>, vector<24x32xf32> -> vector<24x32xf32>
    %cst_14 = arith.constant 0.000000e+00 : f32
    %32 = vector.broadcast %cst_14 : f32 to vector<24x32xf32>
    %33 = arith.maximumf %31, %32 : vector<24x32xf32>
    %c2 = arith.constant 2 : index
    %c0_15 = arith.constant 0 : index
    %34 = vector.load %arg3[%c2, %c0_15] : memref<17x32xf32, #tpu.memory_space<vmem>>, vector<1x32xf32>
    %c5 = arith.constant 5 : index
    %c0_16 = arith.constant 0 : index
    %35 = vector.load %arg3[%c5, %c0_16] : memref<17x32xf32, #tpu.memory_space<vmem>>, vector<1x32xf32>
    %cst_17 = arith.constant dense<0.000000e+00> : vector<32xf32>
    %36 = vector.multi_reduction <add>, %33, %cst_17 [0] : vector<24x32xf32> to vector<32xf32>
    %37 = vector.shape_cast %36 : vector<32xf32> to vector<1x32xf32>
    %cst_18 = arith.constant 2.400000e+01 : f32
    %38 = vector.broadcast %cst_18 : f32 to vector<1x32xf32>
    %39 = arith.divf %37, %38 : vector<1x32xf32>
    %40 = vector.broadcast %39 : vector<1x32xf32> to vector<24x32xf32>
    %41 = arith.subf %33, %40 : vector<24x32xf32>
    %42 = arith.mulf %41, %41 : vector<24x32xf32>
    %cst_19 = arith.constant dense<0.000000e+00> : vector<32xf32>
    %43 = vector.multi_reduction <add>, %42, %cst_19 [0] : vector<24x32xf32> to vector<32xf32>
    %44 = vector.shape_cast %43 : vector<32xf32> to vector<1x32xf32>
    %cst_20 = arith.constant 2.400000e+01 : f32
    %45 = vector.broadcast %cst_20 : f32 to vector<1x32xf32>
    %46 = arith.divf %44, %45 : vector<1x32xf32>
    %47 = vector.broadcast %39 : vector<1x32xf32> to vector<24x32xf32>
    %48 = arith.subf %33, %47 : vector<24x32xf32>
    %cst_21 = arith.constant 9.99999974E-6 : f32
    %49 = vector.broadcast %cst_21 : f32 to vector<1x32xf32>
    %50 = arith.addf %46, %49 : vector<1x32xf32>
    %51 = math.rsqrt %50 : vector<1x32xf32>
    %52 = vector.broadcast %51 : vector<1x32xf32> to vector<24x32xf32>
    %53 = arith.mulf %48, %52 : vector<24x32xf32>
    %54 = vector.broadcast %34 : vector<1x32xf32> to vector<24x32xf32>
    %55 = arith.mulf %53, %54 : vector<24x32xf32>
    %56 = vector.broadcast %35 : vector<1x32xf32> to vector<24x32xf32>
    %57 = arith.addf %55, %56 : vector<24x32xf32>
    %c0_22 = arith.constant 0 : index
    %c0_23 = arith.constant 0 : index
    %c0_24 = arith.constant 0 : index
    %58 = vector.load %arg5[%c0_22, %c0_23, %c0_24] : memref<3x32x36xf32, #tpu.memory_space<vmem>>, vector<1x32x36xf32>
    %59 = vector.shape_cast %58 : vector<1x32x36xf32> to vector<32x36xf32>
    %cst_25 = arith.constant dense<0.000000e+00> : vector<24x36xf32>
    %60 = tpu.matmul %57, %59, %cst_25 {dimension_numbers = #tpu.dot_dimension_numbers<[1], [0], [0], [1], [0, 0, 1, 1], [], []>} : vector<24x32xf32>, vector<32x36xf32>, vector<24x36xf32> -> vector<24x36xf32>
    %61 = vector.extract_strided_slice %60 {offsets = [0, 0], sizes = [24, 32], strides = [1, 1]} : vector<24x36xf32> to vector<24x32xf32>
    %62 = vector.extract_strided_slice %60 {offsets = [0, 32], sizes = [24, 4], strides = [1, 1]} : vector<24x36xf32> to vector<24x4xf32>
    %c0_26 = arith.constant 0 : index
    %c0_27 = arith.constant 0 : index
    %c0_28 = arith.constant 0 : index
    %63 = vector.load %arg6[%c0_26, %c0_27, %c0_28] : memref<3x4x32xf32, #tpu.memory_space<vmem>>, vector<1x4x32xf32>
    %64 = vector.shape_cast %63 : vector<1x4x32xf32> to vector<4x32xf32>
    %cst_29 = arith.constant dense<0.000000e+00> : vector<4x24xf32>
    %65 = tpu.matmul %64, %57, %cst_29 {dimension_numbers = #tpu.dot_dimension_numbers<[1], [1], [0], [0], [0, 0, 1, 0], [], []>} : vector<4x32xf32>, vector<24x32xf32>, vector<4x24xf32> -> vector<4x24xf32>
    %66 = vector.extract_strided_slice %62 {offsets = [0, 0], sizes = [24, 1], strides = [1, 1]} : vector<24x4xf32> to vector<24x1xf32>
    %67 = vector.extract_strided_slice %65 {offsets = [0, 0], sizes = [1, 24], strides = [1, 1]} : vector<4x24xf32> to vector<1x24xf32>
    %68 = vector.broadcast %66 : vector<24x1xf32> to vector<24x24xf32>
    %69 = vector.broadcast %67 : vector<1x24xf32> to vector<24x24xf32>
    %70 = arith.addf %68, %69 : vector<24x24xf32>
    %cst_30 = arith.constant 0.000000e+00 : f32
    %71 = vector.broadcast %cst_30 : f32 to vector<24x24xf32>
    %72 = arith.cmpf ogt, %70, %71 : vector<24x24xf32>
    %cst_31 = arith.constant 2.000000e-01 : f32
    %73 = vector.broadcast %cst_31 : f32 to vector<24x24xf32>
    %74 = arith.mulf %73, %70 : vector<24x24xf32>
    %75 = arith.select %72, %70, %74 : vector<24x24xi1>, vector<24x24xf32>
    %cst_32 = arith.constant -1.000000e+30 : f32
    %76 = vector.broadcast %cst_32 : f32 to vector<24x24xf32>
    %77 = arith.select %2, %75, %76 : vector<24x24xi1>, vector<24x24xf32>
    %cst_33 = arith.constant dense<0xFF800000> : vector<24xf32>
    %78 = vector.multi_reduction <maximumf>, %77, %cst_33 [1] : vector<24x24xf32> to vector<24xf32>
    %79 = vector.shape_cast %78 : vector<24xf32> to vector<24x1xf32>
    %80 = vector.broadcast %79 : vector<24x1xf32> to vector<24x24xf32>
    %81 = arith.subf %77, %80 : vector<24x24xf32>
    %82 = math.exp %81 : vector<24x24xf32>
    %cst_34 = arith.constant dense<0.000000e+00> : vector<24xf32>
    %83 = vector.multi_reduction <add>, %82, %cst_34 [1] : vector<24x24xf32> to vector<24xf32>
    %84 = vector.shape_cast %83 : vector<24xf32> to vector<24x1xf32>
    %85 = tpu.reciprocal %84 {approx = true} : vector<24x1xf32> -> vector<24x1xf32>
    %86 = vector.broadcast %85 : vector<24x1xf32> to vector<24x24xf32>
    %87 = arith.mulf %82, %86 : vector<24x24xf32>
    %88 = vector.extract_strided_slice %61 {offsets = [0, 0], sizes = [24, 8], strides = [1, 1]} : vector<24x32xf32> to vector<24x8xf32>
    %cst_35 = arith.constant dense<0.000000e+00> : vector<24x8xf32>
    %89 = tpu.matmul %87, %88, %cst_35 {dimension_numbers = #tpu.dot_dimension_numbers<[1], [0], [0], [1], [0, 0, 1, 1], [], []>} : vector<24x24xf32>, vector<24x8xf32>, vector<24x8xf32> -> vector<24x8xf32>
    %90 = vector.extract_strided_slice %62 {offsets = [0, 1], sizes = [24, 1], strides = [1, 1]} : vector<24x4xf32> to vector<24x1xf32>
    %91 = vector.extract_strided_slice %65 {offsets = [1, 0], sizes = [1, 24], strides = [1, 1]} : vector<4x24xf32> to vector<1x24xf32>
    %92 = vector.broadcast %90 : vector<24x1xf32> to vector<24x24xf32>
    %93 = vector.broadcast %91 : vector<1x24xf32> to vector<24x24xf32>
    %94 = arith.addf %92, %93 : vector<24x24xf32>
    %cst_36 = arith.constant 0.000000e+00 : f32
    %95 = vector.broadcast %cst_36 : f32 to vector<24x24xf32>
    %96 = arith.cmpf ogt, %94, %95 : vector<24x24xf32>
    %cst_37 = arith.constant 2.000000e-01 : f32
    %97 = vector.broadcast %cst_37 : f32 to vector<24x24xf32>
    %98 = arith.mulf %97, %94 : vector<24x24xf32>
    %99 = arith.select %96, %94, %98 : vector<24x24xi1>, vector<24x24xf32>
    %cst_38 = arith.constant -1.000000e+30 : f32
    %100 = vector.broadcast %cst_38 : f32 to vector<24x24xf32>
    %101 = arith.select %2, %99, %100 : vector<24x24xi1>, vector<24x24xf32>
    %cst_39 = arith.constant dense<0xFF800000> : vector<24xf32>
    %102 = vector.multi_reduction <maximumf>, %101, %cst_39 [1] : vector<24x24xf32> to vector<24xf32>
    %103 = vector.shape_cast %102 : vector<24xf32> to vector<24x1xf32>
    %104 = vector.broadcast %103 : vector<24x1xf32> to vector<24x24xf32>
    %105 = arith.subf %101, %104 : vector<24x24xf32>
    %106 = math.exp %105 : vector<24x24xf32>
    %cst_40 = arith.constant dense<0.000000e+00> : vector<24xf32>
    %107 = vector.multi_reduction <add>, %106, %cst_40 [1] : vector<24x24xf32> to vector<24xf32>
    %108 = vector.shape_cast %107 : vector<24xf32> to vector<24x1xf32>
    %109 = tpu.reciprocal %108 {approx = true} : vector<24x1xf32> -> vector<24x1xf32>
    %110 = vector.broadcast %109 : vector<24x1xf32> to vector<24x24xf32>
    %111 = arith.mulf %106, %110 : vector<24x24xf32>
    %112 = vector.extract_strided_slice %61 {offsets = [0, 8], sizes = [24, 8], strides = [1, 1]} : vector<24x32xf32> to vector<24x8xf32>
    %cst_41 = arith.constant dense<0.000000e+00> : vector<24x8xf32>
    %113 = tpu.matmul %111, %112, %cst_41 {dimension_numbers = #tpu.dot_dimension_numbers<[1], [0], [0], [1], [0, 0, 1, 1], [], []>} : vector<24x24xf32>, vector<24x8xf32>, vector<24x8xf32> -> vector<24x8xf32>
    %114 = vector.extract_strided_slice %62 {offsets = [0, 2], sizes = [24, 1], strides = [1, 1]} : vector<24x4xf32> to vector<24x1xf32>
    %115 = vector.extract_strided_slice %65 {offsets = [2, 0], sizes = [1, 24], strides = [1, 1]} : vector<4x24xf32> to vector<1x24xf32>
    %116 = vector.broadcast %114 : vector<24x1xf32> to vector<24x24xf32>
    %117 = vector.broadcast %115 : vector<1x24xf32> to vector<24x24xf32>
    %118 = arith.addf %116, %117 : vector<24x24xf32>
    %cst_42 = arith.constant 0.000000e+00 : f32
    %119 = vector.broadcast %cst_42 : f32 to vector<24x24xf32>
    %120 = arith.cmpf ogt, %118, %119 : vector<24x24xf32>
    %cst_43 = arith.constant 2.000000e-01 : f32
    %121 = vector.broadcast %cst_43 : f32 to vector<24x24xf32>
    %122 = arith.mulf %121, %118 : vector<24x24xf32>
    %123 = arith.select %120, %118, %122 : vector<24x24xi1>, vector<24x24xf32>
    %cst_44 = arith.constant -1.000000e+30 : f32
    %124 = vector.broadcast %cst_44 : f32 to vector<24x24xf32>
    %125 = arith.select %2, %123, %124 : vector<24x24xi1>, vector<24x24xf32>
    %cst_45 = arith.constant dense<0xFF800000> : vector<24xf32>
    %126 = vector.multi_reduction <maximumf>, %125, %cst_45 [1] : vector<24x24xf32> to vector<24xf32>
    %127 = vector.shape_cast %126 : vector<24xf32> to vector<24x1xf32>
    %128 = vector.broadcast %127 : vector<24x1xf32> to vector<24x24xf32>
    %129 = arith.subf %125, %128 : vector<24x24xf32>
    %130 = math.exp %129 : vector<24x24xf32>
    %cst_46 = arith.constant dense<0.000000e+00> : vector<24xf32>
    %131 = vector.multi_reduction <add>, %130, %cst_46 [1] : vector<24x24xf32> to vector<24xf32>
    %132 = vector.shape_cast %131 : vector<24xf32> to vector<24x1xf32>
    %133 = tpu.reciprocal %132 {approx = true} : vector<24x1xf32> -> vector<24x1xf32>
    %134 = vector.broadcast %133 : vector<24x1xf32> to vector<24x24xf32>
    %135 = arith.mulf %130, %134 : vector<24x24xf32>
    %136 = vector.extract_strided_slice %61 {offsets = [0, 16], sizes = [24, 8], strides = [1, 1]} : vector<24x32xf32> to vector<24x8xf32>
    %cst_47 = arith.constant dense<0.000000e+00> : vector<24x8xf32>
    %137 = tpu.matmul %135, %136, %cst_47 {dimension_numbers = #tpu.dot_dimension_numbers<[1], [0], [0], [1], [0, 0, 1, 1], [], []>} : vector<24x24xf32>, vector<24x8xf32>, vector<24x8xf32> -> vector<24x8xf32>
    %138 = vector.extract_strided_slice %62 {offsets = [0, 3], sizes = [24, 1], strides = [1, 1]} : vector<24x4xf32> to vector<24x1xf32>
    %139 = vector.extract_strided_slice %65 {offsets = [3, 0], sizes = [1, 24], strides = [1, 1]} : vector<4x24xf32> to vector<1x24xf32>
    %140 = vector.broadcast %138 : vector<24x1xf32> to vector<24x24xf32>
    %141 = vector.broadcast %139 : vector<1x24xf32> to vector<24x24xf32>
    %142 = arith.addf %140, %141 : vector<24x24xf32>
    %cst_48 = arith.constant 0.000000e+00 : f32
    %143 = vector.broadcast %cst_48 : f32 to vector<24x24xf32>
    %144 = arith.cmpf ogt, %142, %143 : vector<24x24xf32>
    %cst_49 = arith.constant 2.000000e-01 : f32
    %145 = vector.broadcast %cst_49 : f32 to vector<24x24xf32>
    %146 = arith.mulf %145, %142 : vector<24x24xf32>
    %147 = arith.select %144, %142, %146 : vector<24x24xi1>, vector<24x24xf32>
    %cst_50 = arith.constant -1.000000e+30 : f32
    %148 = vector.broadcast %cst_50 : f32 to vector<24x24xf32>
    %149 = arith.select %2, %147, %148 : vector<24x24xi1>, vector<24x24xf32>
    %cst_51 = arith.constant dense<0xFF800000> : vector<24xf32>
    %150 = vector.multi_reduction <maximumf>, %149, %cst_51 [1] : vector<24x24xf32> to vector<24xf32>
    %151 = vector.shape_cast %150 : vector<24xf32> to vector<24x1xf32>
    %152 = vector.broadcast %151 : vector<24x1xf32> to vector<24x24xf32>
    %153 = arith.subf %149, %152 : vector<24x24xf32>
    %154 = math.exp %153 : vector<24x24xf32>
    %cst_52 = arith.constant dense<0.000000e+00> : vector<24xf32>
    %155 = vector.multi_reduction <add>, %154, %cst_52 [1] : vector<24x24xf32> to vector<24xf32>
    %156 = vector.shape_cast %155 : vector<24xf32> to vector<24x1xf32>
    %157 = tpu.reciprocal %156 {approx = true} : vector<24x1xf32> -> vector<24x1xf32>
    %158 = vector.broadcast %157 : vector<24x1xf32> to vector<24x24xf32>
    %159 = arith.mulf %154, %158 : vector<24x24xf32>
    %160 = vector.extract_strided_slice %61 {offsets = [0, 24], sizes = [24, 8], strides = [1, 1]} : vector<24x32xf32> to vector<24x8xf32>
    %cst_53 = arith.constant dense<0.000000e+00> : vector<24x8xf32>
    %161 = tpu.matmul %159, %160, %cst_53 {dimension_numbers = #tpu.dot_dimension_numbers<[1], [0], [0], [1], [0, 0, 1, 1], [], []>} : vector<24x24xf32>, vector<24x8xf32>, vector<24x8xf32> -> vector<24x8xf32>
    %c8 = arith.constant 8 : index
    %c0_54 = arith.constant 0 : index
    %162 = vector.load %arg3[%c8, %c0_54] : memref<17x32xf32, #tpu.memory_space<vmem>>, vector<1x32xf32>
    %163 = tpu.concatenate %89, %113, %137, %161 in 1 : vector<24x8xf32>, vector<24x8xf32>, vector<24x8xf32>, vector<24x8xf32> -> vector<24x32xf32>
    %164 = vector.broadcast %162 : vector<1x32xf32> to vector<24x32xf32>
    %165 = arith.addf %163, %164 : vector<24x32xf32>
    %cst_55 = arith.constant 0.000000e+00 : f32
    %166 = vector.broadcast %cst_55 : f32 to vector<24x32xf32>
    %167 = arith.maximumf %165, %166 : vector<24x32xf32>
    %c3 = arith.constant 3 : index
    %c0_56 = arith.constant 0 : index
    %168 = vector.load %arg3[%c3, %c0_56] : memref<17x32xf32, #tpu.memory_space<vmem>>, vector<1x32xf32>
    %c6 = arith.constant 6 : index
    %c0_57 = arith.constant 0 : index
    %169 = vector.load %arg3[%c6, %c0_57] : memref<17x32xf32, #tpu.memory_space<vmem>>, vector<1x32xf32>
    %cst_58 = arith.constant dense<0.000000e+00> : vector<32xf32>
    %170 = vector.multi_reduction <add>, %167, %cst_58 [0] : vector<24x32xf32> to vector<32xf32>
    %171 = vector.shape_cast %170 : vector<32xf32> to vector<1x32xf32>
    %cst_59 = arith.constant 2.400000e+01 : f32
    %172 = vector.broadcast %cst_59 : f32 to vector<1x32xf32>
    %173 = arith.divf %171, %172 : vector<1x32xf32>
    %174 = vector.broadcast %173 : vector<1x32xf32> to vector<24x32xf32>
    %175 = arith.subf %167, %174 : vector<24x32xf32>
    %176 = arith.mulf %175, %175 : vector<24x32xf32>
    %cst_60 = arith.constant dense<0.000000e+00> : vector<32xf32>
    %177 = vector.multi_reduction <add>, %176, %cst_60 [0] : vector<24x32xf32> to vector<32xf32>
    %178 = vector.shape_cast %177 : vector<32xf32> to vector<1x32xf32>
    %cst_61 = arith.constant 2.400000e+01 : f32
    %179 = vector.broadcast %cst_61 : f32 to vector<1x32xf32>
    %180 = arith.divf %178, %179 : vector<1x32xf32>
    %181 = vector.broadcast %173 : vector<1x32xf32> to vector<24x32xf32>
    %182 = arith.subf %167, %181 : vector<24x32xf32>
    %cst_62 = arith.constant 9.99999974E-6 : f32
    %183 = vector.broadcast %cst_62 : f32 to vector<1x32xf32>
    %184 = arith.addf %180, %183 : vector<1x32xf32>
    %185 = math.rsqrt %184 : vector<1x32xf32>
    %186 = vector.broadcast %185 : vector<1x32xf32> to vector<24x32xf32>
    %187 = arith.mulf %182, %186 : vector<24x32xf32>
    %188 = vector.broadcast %168 : vector<1x32xf32> to vector<24x32xf32>
    %189 = arith.mulf %187, %188 : vector<24x32xf32>
    %190 = vector.broadcast %169 : vector<1x32xf32> to vector<24x32xf32>
    %191 = arith.addf %189, %190 : vector<24x32xf32>
    %c1_63 = arith.constant 1 : index
    %c0_64 = arith.constant 0 : index
    %c0_65 = arith.constant 0 : index
    %192 = vector.load %arg5[%c1_63, %c0_64, %c0_65] : memref<3x32x36xf32, #tpu.memory_space<vmem>>, vector<1x32x36xf32>
    %193 = vector.shape_cast %192 : vector<1x32x36xf32> to vector<32x36xf32>
    %cst_66 = arith.constant dense<0.000000e+00> : vector<24x36xf32>
    %194 = tpu.matmul %191, %193, %cst_66 {dimension_numbers = #tpu.dot_dimension_numbers<[1], [0], [0], [1], [0, 0, 1, 1], [], []>} : vector<24x32xf32>, vector<32x36xf32>, vector<24x36xf32> -> vector<24x36xf32>
    %195 = vector.extract_strided_slice %194 {offsets = [0, 0], sizes = [24, 32], strides = [1, 1]} : vector<24x36xf32> to vector<24x32xf32>
    %196 = vector.extract_strided_slice %194 {offsets = [0, 32], sizes = [24, 4], strides = [1, 1]} : vector<24x36xf32> to vector<24x4xf32>
    %c1_67 = arith.constant 1 : index
    %c0_68 = arith.constant 0 : index
    %c0_69 = arith.constant 0 : index
    %197 = vector.load %arg6[%c1_67, %c0_68, %c0_69] : memref<3x4x32xf32, #tpu.memory_space<vmem>>, vector<1x4x32xf32>
    %198 = vector.shape_cast %197 : vector<1x4x32xf32> to vector<4x32xf32>
    %cst_70 = arith.constant dense<0.000000e+00> : vector<4x24xf32>
    %199 = tpu.matmul %198, %191, %cst_70 {dimension_numbers = #tpu.dot_dimension_numbers<[1], [1], [0], [0], [0, 0, 1, 0], [], []>} : vector<4x32xf32>, vector<24x32xf32>, vector<4x24xf32> -> vector<4x24xf32>
    %200 = vector.extract_strided_slice %196 {offsets = [0, 0], sizes = [24, 1], strides = [1, 1]} : vector<24x4xf32> to vector<24x1xf32>
    %201 = vector.extract_strided_slice %199 {offsets = [0, 0], sizes = [1, 24], strides = [1, 1]} : vector<4x24xf32> to vector<1x24xf32>
    %202 = vector.broadcast %200 : vector<24x1xf32> to vector<24x24xf32>
    %203 = vector.broadcast %201 : vector<1x24xf32> to vector<24x24xf32>
    %204 = arith.addf %202, %203 : vector<24x24xf32>
    %cst_71 = arith.constant 0.000000e+00 : f32
    %205 = vector.broadcast %cst_71 : f32 to vector<24x24xf32>
    %206 = arith.cmpf ogt, %204, %205 : vector<24x24xf32>
    %cst_72 = arith.constant 2.000000e-01 : f32
    %207 = vector.broadcast %cst_72 : f32 to vector<24x24xf32>
    %208 = arith.mulf %207, %204 : vector<24x24xf32>
    %209 = arith.select %206, %204, %208 : vector<24x24xi1>, vector<24x24xf32>
    %cst_73 = arith.constant -1.000000e+30 : f32
    %210 = vector.broadcast %cst_73 : f32 to vector<24x24xf32>
    %211 = arith.select %2, %209, %210 : vector<24x24xi1>, vector<24x24xf32>
    %cst_74 = arith.constant dense<0xFF800000> : vector<24xf32>
    %212 = vector.multi_reduction <maximumf>, %211, %cst_74 [1] : vector<24x24xf32> to vector<24xf32>
    %213 = vector.shape_cast %212 : vector<24xf32> to vector<24x1xf32>
    %214 = vector.broadcast %213 : vector<24x1xf32> to vector<24x24xf32>
    %215 = arith.subf %211, %214 : vector<24x24xf32>
    %216 = math.exp %215 : vector<24x24xf32>
    %cst_75 = arith.constant dense<0.000000e+00> : vector<24xf32>
    %217 = vector.multi_reduction <add>, %216, %cst_75 [1] : vector<24x24xf32> to vector<24xf32>
    %218 = vector.shape_cast %217 : vector<24xf32> to vector<24x1xf32>
    %219 = tpu.reciprocal %218 {approx = true} : vector<24x1xf32> -> vector<24x1xf32>
    %220 = vector.broadcast %219 : vector<24x1xf32> to vector<24x24xf32>
    %221 = arith.mulf %216, %220 : vector<24x24xf32>
    %222 = vector.extract_strided_slice %195 {offsets = [0, 0], sizes = [24, 8], strides = [1, 1]} : vector<24x32xf32> to vector<24x8xf32>
    %cst_76 = arith.constant dense<0.000000e+00> : vector<24x8xf32>
    %223 = tpu.matmul %221, %222, %cst_76 {dimension_numbers = #tpu.dot_dimension_numbers<[1], [0], [0], [1], [0, 0, 1, 1], [], []>} : vector<24x24xf32>, vector<24x8xf32>, vector<24x8xf32> -> vector<24x8xf32>
    %224 = vector.extract_strided_slice %196 {offsets = [0, 1], sizes = [24, 1], strides = [1, 1]} : vector<24x4xf32> to vector<24x1xf32>
    %225 = vector.extract_strided_slice %199 {offsets = [1, 0], sizes = [1, 24], strides = [1, 1]} : vector<4x24xf32> to vector<1x24xf32>
    %226 = vector.broadcast %224 : vector<24x1xf32> to vector<24x24xf32>
    %227 = vector.broadcast %225 : vector<1x24xf32> to vector<24x24xf32>
    %228 = arith.addf %226, %227 : vector<24x24xf32>
    %cst_77 = arith.constant 0.000000e+00 : f32
    %229 = vector.broadcast %cst_77 : f32 to vector<24x24xf32>
    %230 = arith.cmpf ogt, %228, %229 : vector<24x24xf32>
    %cst_78 = arith.constant 2.000000e-01 : f32
    %231 = vector.broadcast %cst_78 : f32 to vector<24x24xf32>
    %232 = arith.mulf %231, %228 : vector<24x24xf32>
    %233 = arith.select %230, %228, %232 : vector<24x24xi1>, vector<24x24xf32>
    %cst_79 = arith.constant -1.000000e+30 : f32
    %234 = vector.broadcast %cst_79 : f32 to vector<24x24xf32>
    %235 = arith.select %2, %233, %234 : vector<24x24xi1>, vector<24x24xf32>
    %cst_80 = arith.constant dense<0xFF800000> : vector<24xf32>
    %236 = vector.multi_reduction <maximumf>, %235, %cst_80 [1] : vector<24x24xf32> to vector<24xf32>
    %237 = vector.shape_cast %236 : vector<24xf32> to vector<24x1xf32>
    %238 = vector.broadcast %237 : vector<24x1xf32> to vector<24x24xf32>
    %239 = arith.subf %235, %238 : vector<24x24xf32>
    %240 = math.exp %239 : vector<24x24xf32>
    %cst_81 = arith.constant dense<0.000000e+00> : vector<24xf32>
    %241 = vector.multi_reduction <add>, %240, %cst_81 [1] : vector<24x24xf32> to vector<24xf32>
    %242 = vector.shape_cast %241 : vector<24xf32> to vector<24x1xf32>
    %243 = tpu.reciprocal %242 {approx = true} : vector<24x1xf32> -> vector<24x1xf32>
    %244 = vector.broadcast %243 : vector<24x1xf32> to vector<24x24xf32>
    %245 = arith.mulf %240, %244 : vector<24x24xf32>
    %246 = vector.extract_strided_slice %195 {offsets = [0, 8], sizes = [24, 8], strides = [1, 1]} : vector<24x32xf32> to vector<24x8xf32>
    %cst_82 = arith.constant dense<0.000000e+00> : vector<24x8xf32>
    %247 = tpu.matmul %245, %246, %cst_82 {dimension_numbers = #tpu.dot_dimension_numbers<[1], [0], [0], [1], [0, 0, 1, 1], [], []>} : vector<24x24xf32>, vector<24x8xf32>, vector<24x8xf32> -> vector<24x8xf32>
    %248 = vector.extract_strided_slice %196 {offsets = [0, 2], sizes = [24, 1], strides = [1, 1]} : vector<24x4xf32> to vector<24x1xf32>
    %249 = vector.extract_strided_slice %199 {offsets = [2, 0], sizes = [1, 24], strides = [1, 1]} : vector<4x24xf32> to vector<1x24xf32>
    %250 = vector.broadcast %248 : vector<24x1xf32> to vector<24x24xf32>
    %251 = vector.broadcast %249 : vector<1x24xf32> to vector<24x24xf32>
    %252 = arith.addf %250, %251 : vector<24x24xf32>
    %cst_83 = arith.constant 0.000000e+00 : f32
    %253 = vector.broadcast %cst_83 : f32 to vector<24x24xf32>
    %254 = arith.cmpf ogt, %252, %253 : vector<24x24xf32>
    %cst_84 = arith.constant 2.000000e-01 : f32
    %255 = vector.broadcast %cst_84 : f32 to vector<24x24xf32>
    %256 = arith.mulf %255, %252 : vector<24x24xf32>
    %257 = arith.select %254, %252, %256 : vector<24x24xi1>, vector<24x24xf32>
    %cst_85 = arith.constant -1.000000e+30 : f32
    %258 = vector.broadcast %cst_85 : f32 to vector<24x24xf32>
    %259 = arith.select %2, %257, %258 : vector<24x24xi1>, vector<24x24xf32>
    %cst_86 = arith.constant dense<0xFF800000> : vector<24xf32>
    %260 = vector.multi_reduction <maximumf>, %259, %cst_86 [1] : vector<24x24xf32> to vector<24xf32>
    %261 = vector.shape_cast %260 : vector<24xf32> to vector<24x1xf32>
    %262 = vector.broadcast %261 : vector<24x1xf32> to vector<24x24xf32>
    %263 = arith.subf %259, %262 : vector<24x24xf32>
    %264 = math.exp %263 : vector<24x24xf32>
    %cst_87 = arith.constant dense<0.000000e+00> : vector<24xf32>
    %265 = vector.multi_reduction <add>, %264, %cst_87 [1] : vector<24x24xf32> to vector<24xf32>
    %266 = vector.shape_cast %265 : vector<24xf32> to vector<24x1xf32>
    %267 = tpu.reciprocal %266 {approx = true} : vector<24x1xf32> -> vector<24x1xf32>
    %268 = vector.broadcast %267 : vector<24x1xf32> to vector<24x24xf32>
    %269 = arith.mulf %264, %268 : vector<24x24xf32>
    %270 = vector.extract_strided_slice %195 {offsets = [0, 16], sizes = [24, 8], strides = [1, 1]} : vector<24x32xf32> to vector<24x8xf32>
    %cst_88 = arith.constant dense<0.000000e+00> : vector<24x8xf32>
    %271 = tpu.matmul %269, %270, %cst_88 {dimension_numbers = #tpu.dot_dimension_numbers<[1], [0], [0], [1], [0, 0, 1, 1], [], []>} : vector<24x24xf32>, vector<24x8xf32>, vector<24x8xf32> -> vector<24x8xf32>
    %272 = vector.extract_strided_slice %196 {offsets = [0, 3], sizes = [24, 1], strides = [1, 1]} : vector<24x4xf32> to vector<24x1xf32>
    %273 = vector.extract_strided_slice %199 {offsets = [3, 0], sizes = [1, 24], strides = [1, 1]} : vector<4x24xf32> to vector<1x24xf32>
    %274 = vector.broadcast %272 : vector<24x1xf32> to vector<24x24xf32>
    %275 = vector.broadcast %273 : vector<1x24xf32> to vector<24x24xf32>
    %276 = arith.addf %274, %275 : vector<24x24xf32>
    %cst_89 = arith.constant 0.000000e+00 : f32
    %277 = vector.broadcast %cst_89 : f32 to vector<24x24xf32>
    %278 = arith.cmpf ogt, %276, %277 : vector<24x24xf32>
    %cst_90 = arith.constant 2.000000e-01 : f32
    %279 = vector.broadcast %cst_90 : f32 to vector<24x24xf32>
    %280 = arith.mulf %279, %276 : vector<24x24xf32>
    %281 = arith.select %278, %276, %280 : vector<24x24xi1>, vector<24x24xf32>
    %cst_91 = arith.constant -1.000000e+30 : f32
    %282 = vector.broadcast %cst_91 : f32 to vector<24x24xf32>
    %283 = arith.select %2, %281, %282 : vector<24x24xi1>, vector<24x24xf32>
    %cst_92 = arith.constant dense<0xFF800000> : vector<24xf32>
    %284 = vector.multi_reduction <maximumf>, %283, %cst_92 [1] : vector<24x24xf32> to vector<24xf32>
    %285 = vector.shape_cast %284 : vector<24xf32> to vector<24x1xf32>
    %286 = vector.broadcast %285 : vector<24x1xf32> to vector<24x24xf32>
    %287 = arith.subf %283, %286 : vector<24x24xf32>
    %288 = math.exp %287 : vector<24x24xf32>
    %cst_93 = arith.constant dense<0.000000e+00> : vector<24xf32>
    %289 = vector.multi_reduction <add>, %288, %cst_93 [1] : vector<24x24xf32> to vector<24xf32>
    %290 = vector.shape_cast %289 : vector<24xf32> to vector<24x1xf32>
    %291 = tpu.reciprocal %290 {approx = true} : vector<24x1xf32> -> vector<24x1xf32>
    %292 = vector.broadcast %291 : vector<24x1xf32> to vector<24x24xf32>
    %293 = arith.mulf %288, %292 : vector<24x24xf32>
    %294 = vector.extract_strided_slice %195 {offsets = [0, 24], sizes = [24, 8], strides = [1, 1]} : vector<24x32xf32> to vector<24x8xf32>
    %cst_94 = arith.constant dense<0.000000e+00> : vector<24x8xf32>
    %295 = tpu.matmul %293, %294, %cst_94 {dimension_numbers = #tpu.dot_dimension_numbers<[1], [0], [0], [1], [0, 0, 1, 1], [], []>} : vector<24x24xf32>, vector<24x8xf32>, vector<24x8xf32> -> vector<24x8xf32>
    %c9 = arith.constant 9 : index
    %c0_95 = arith.constant 0 : index
    %296 = vector.load %arg3[%c9, %c0_95] : memref<17x32xf32, #tpu.memory_space<vmem>>, vector<1x32xf32>
    %297 = tpu.concatenate %223, %247, %271, %295 in 1 : vector<24x8xf32>, vector<24x8xf32>, vector<24x8xf32>, vector<24x8xf32> -> vector<24x32xf32>
    %298 = vector.broadcast %296 : vector<1x32xf32> to vector<24x32xf32>
    %299 = arith.addf %297, %298 : vector<24x32xf32>
    %cst_96 = arith.constant 0.000000e+00 : f32
    %300 = vector.broadcast %cst_96 : f32 to vector<24x32xf32>
    %301 = arith.maximumf %299, %300 : vector<24x32xf32>
    %c4 = arith.constant 4 : index
    %c0_97 = arith.constant 0 : index
    %302 = vector.load %arg3[%c4, %c0_97] : memref<17x32xf32, #tpu.memory_space<vmem>>, vector<1x32xf32>
    %c7 = arith.constant 7 : index
    %c0_98 = arith.constant 0 : index
    %303 = vector.load %arg3[%c7, %c0_98] : memref<17x32xf32, #tpu.memory_space<vmem>>, vector<1x32xf32>
    %cst_99 = arith.constant dense<0.000000e+00> : vector<32xf32>
    %304 = vector.multi_reduction <add>, %301, %cst_99 [0] : vector<24x32xf32> to vector<32xf32>
    %305 = vector.shape_cast %304 : vector<32xf32> to vector<1x32xf32>
    %cst_100 = arith.constant 2.400000e+01 : f32
    %306 = vector.broadcast %cst_100 : f32 to vector<1x32xf32>
    %307 = arith.divf %305, %306 : vector<1x32xf32>
    %308 = vector.broadcast %307 : vector<1x32xf32> to vector<24x32xf32>
    %309 = arith.subf %301, %308 : vector<24x32xf32>
    %310 = arith.mulf %309, %309 : vector<24x32xf32>
    %cst_101 = arith.constant dense<0.000000e+00> : vector<32xf32>
    %311 = vector.multi_reduction <add>, %310, %cst_101 [0] : vector<24x32xf32> to vector<32xf32>
    %312 = vector.shape_cast %311 : vector<32xf32> to vector<1x32xf32>
    %cst_102 = arith.constant 2.400000e+01 : f32
    %313 = vector.broadcast %cst_102 : f32 to vector<1x32xf32>
    %314 = arith.divf %312, %313 : vector<1x32xf32>
    %315 = vector.broadcast %307 : vector<1x32xf32> to vector<24x32xf32>
    %316 = arith.subf %301, %315 : vector<24x32xf32>
    %cst_103 = arith.constant 9.99999974E-6 : f32
    %317 = vector.broadcast %cst_103 : f32 to vector<1x32xf32>
    %318 = arith.addf %314, %317 : vector<1x32xf32>
    %319 = math.rsqrt %318 : vector<1x32xf32>
    %320 = vector.broadcast %319 : vector<1x32xf32> to vector<24x32xf32>
    %321 = arith.mulf %316, %320 : vector<24x32xf32>
    %322 = vector.broadcast %302 : vector<1x32xf32> to vector<24x32xf32>
    %323 = arith.mulf %321, %322 : vector<24x32xf32>
    %324 = vector.broadcast %303 : vector<1x32xf32> to vector<24x32xf32>
    %325 = arith.addf %323, %324 : vector<24x32xf32>
    %c2_104 = arith.constant 2 : index
    %c0_105 = arith.constant 0 : index
    %c0_106 = arith.constant 0 : index
    %326 = vector.load %arg5[%c2_104, %c0_105, %c0_106] : memref<3x32x36xf32, #tpu.memory_space<vmem>>, vector<1x32x36xf32>
    %327 = vector.shape_cast %326 : vector<1x32x36xf32> to vector<32x36xf32>
    %cst_107 = arith.constant dense<0.000000e+00> : vector<24x36xf32>
    %328 = tpu.matmul %325, %327, %cst_107 {dimension_numbers = #tpu.dot_dimension_numbers<[1], [0], [0], [1], [0, 0, 1, 1], [], []>} : vector<24x32xf32>, vector<32x36xf32>, vector<24x36xf32> -> vector<24x36xf32>
    %329 = vector.extract_strided_slice %328 {offsets = [0, 0], sizes = [24, 32], strides = [1, 1]} : vector<24x36xf32> to vector<24x32xf32>
    %330 = vector.extract_strided_slice %328 {offsets = [0, 32], sizes = [24, 4], strides = [1, 1]} : vector<24x36xf32> to vector<24x4xf32>
    %c2_108 = arith.constant 2 : index
    %c0_109 = arith.constant 0 : index
    %c0_110 = arith.constant 0 : index
    %331 = vector.load %arg6[%c2_108, %c0_109, %c0_110] : memref<3x4x32xf32, #tpu.memory_space<vmem>>, vector<1x4x32xf32>
    %332 = vector.shape_cast %331 : vector<1x4x32xf32> to vector<4x32xf32>
    %cst_111 = arith.constant dense<0.000000e+00> : vector<4x24xf32>
    %333 = tpu.matmul %332, %325, %cst_111 {dimension_numbers = #tpu.dot_dimension_numbers<[1], [1], [0], [0], [0, 0, 1, 0], [], []>} : vector<4x32xf32>, vector<24x32xf32>, vector<4x24xf32> -> vector<4x24xf32>
    %334 = vector.extract_strided_slice %330 {offsets = [0, 0], sizes = [24, 1], strides = [1, 1]} : vector<24x4xf32> to vector<24x1xf32>
    %335 = vector.extract_strided_slice %333 {offsets = [0, 0], sizes = [1, 24], strides = [1, 1]} : vector<4x24xf32> to vector<1x24xf32>
    %336 = vector.broadcast %334 : vector<24x1xf32> to vector<24x24xf32>
    %337 = vector.broadcast %335 : vector<1x24xf32> to vector<24x24xf32>
    %338 = arith.addf %336, %337 : vector<24x24xf32>
    %cst_112 = arith.constant 0.000000e+00 : f32
    %339 = vector.broadcast %cst_112 : f32 to vector<24x24xf32>
    %340 = arith.cmpf ogt, %338, %339 : vector<24x24xf32>
    %cst_113 = arith.constant 2.000000e-01 : f32
    %341 = vector.broadcast %cst_113 : f32 to vector<24x24xf32>
    %342 = arith.mulf %341, %338 : vector<24x24xf32>
    %343 = arith.select %340, %338, %342 : vector<24x24xi1>, vector<24x24xf32>
    %cst_114 = arith.constant -1.000000e+30 : f32
    %344 = vector.broadcast %cst_114 : f32 to vector<24x24xf32>
    %345 = arith.select %2, %343, %344 : vector<24x24xi1>, vector<24x24xf32>
    %cst_115 = arith.constant dense<0xFF800000> : vector<24xf32>
    %346 = vector.multi_reduction <maximumf>, %345, %cst_115 [1] : vector<24x24xf32> to vector<24xf32>
    %347 = vector.shape_cast %346 : vector<24xf32> to vector<24x1xf32>
    %348 = vector.broadcast %347 : vector<24x1xf32> to vector<24x24xf32>
    %349 = arith.subf %345, %348 : vector<24x24xf32>
    %350 = math.exp %349 : vector<24x24xf32>
    %cst_116 = arith.constant dense<0.000000e+00> : vector<24xf32>
    %351 = vector.multi_reduction <add>, %350, %cst_116 [1] : vector<24x24xf32> to vector<24xf32>
    %352 = vector.shape_cast %351 : vector<24xf32> to vector<24x1xf32>
    %353 = tpu.reciprocal %352 {approx = true} : vector<24x1xf32> -> vector<24x1xf32>
    %354 = vector.broadcast %353 : vector<24x1xf32> to vector<24x24xf32>
    %355 = arith.mulf %350, %354 : vector<24x24xf32>
    %356 = vector.extract_strided_slice %329 {offsets = [0, 0], sizes = [24, 8], strides = [1, 1]} : vector<24x32xf32> to vector<24x8xf32>
    %cst_117 = arith.constant dense<0.000000e+00> : vector<24x8xf32>
    %357 = tpu.matmul %355, %356, %cst_117 {dimension_numbers = #tpu.dot_dimension_numbers<[1], [0], [0], [1], [0, 0, 1, 1], [], []>} : vector<24x24xf32>, vector<24x8xf32>, vector<24x8xf32> -> vector<24x8xf32>
    %358 = vector.extract_strided_slice %330 {offsets = [0, 1], sizes = [24, 1], strides = [1, 1]} : vector<24x4xf32> to vector<24x1xf32>
    %359 = vector.extract_strided_slice %333 {offsets = [1, 0], sizes = [1, 24], strides = [1, 1]} : vector<4x24xf32> to vector<1x24xf32>
    %360 = vector.broadcast %358 : vector<24x1xf32> to vector<24x24xf32>
    %361 = vector.broadcast %359 : vector<1x24xf32> to vector<24x24xf32>
    %362 = arith.addf %360, %361 : vector<24x24xf32>
    %cst_118 = arith.constant 0.000000e+00 : f32
    %363 = vector.broadcast %cst_118 : f32 to vector<24x24xf32>
    %364 = arith.cmpf ogt, %362, %363 : vector<24x24xf32>
    %cst_119 = arith.constant 2.000000e-01 : f32
    %365 = vector.broadcast %cst_119 : f32 to vector<24x24xf32>
    %366 = arith.mulf %365, %362 : vector<24x24xf32>
    %367 = arith.select %364, %362, %366 : vector<24x24xi1>, vector<24x24xf32>
    %cst_120 = arith.constant -1.000000e+30 : f32
    %368 = vector.broadcast %cst_120 : f32 to vector<24x24xf32>
    %369 = arith.select %2, %367, %368 : vector<24x24xi1>, vector<24x24xf32>
    %cst_121 = arith.constant dense<0xFF800000> : vector<24xf32>
    %370 = vector.multi_reduction <maximumf>, %369, %cst_121 [1] : vector<24x24xf32> to vector<24xf32>
    %371 = vector.shape_cast %370 : vector<24xf32> to vector<24x1xf32>
    %372 = vector.broadcast %371 : vector<24x1xf32> to vector<24x24xf32>
    %373 = arith.subf %369, %372 : vector<24x24xf32>
    %374 = math.exp %373 : vector<24x24xf32>
    %cst_122 = arith.constant dense<0.000000e+00> : vector<24xf32>
    %375 = vector.multi_reduction <add>, %374, %cst_122 [1] : vector<24x24xf32> to vector<24xf32>
    %376 = vector.shape_cast %375 : vector<24xf32> to vector<24x1xf32>
    %377 = tpu.reciprocal %376 {approx = true} : vector<24x1xf32> -> vector<24x1xf32>
    %378 = vector.broadcast %377 : vector<24x1xf32> to vector<24x24xf32>
    %379 = arith.mulf %374, %378 : vector<24x24xf32>
    %380 = vector.extract_strided_slice %329 {offsets = [0, 8], sizes = [24, 8], strides = [1, 1]} : vector<24x32xf32> to vector<24x8xf32>
    %cst_123 = arith.constant dense<0.000000e+00> : vector<24x8xf32>
    %381 = tpu.matmul %379, %380, %cst_123 {dimension_numbers = #tpu.dot_dimension_numbers<[1], [0], [0], [1], [0, 0, 1, 1], [], []>} : vector<24x24xf32>, vector<24x8xf32>, vector<24x8xf32> -> vector<24x8xf32>
    %382 = vector.extract_strided_slice %330 {offsets = [0, 2], sizes = [24, 1], strides = [1, 1]} : vector<24x4xf32> to vector<24x1xf32>
    %383 = vector.extract_strided_slice %333 {offsets = [2, 0], sizes = [1, 24], strides = [1, 1]} : vector<4x24xf32> to vector<1x24xf32>
    %384 = vector.broadcast %382 : vector<24x1xf32> to vector<24x24xf32>
    %385 = vector.broadcast %383 : vector<1x24xf32> to vector<24x24xf32>
    %386 = arith.addf %384, %385 : vector<24x24xf32>
    %cst_124 = arith.constant 0.000000e+00 : f32
    %387 = vector.broadcast %cst_124 : f32 to vector<24x24xf32>
    %388 = arith.cmpf ogt, %386, %387 : vector<24x24xf32>
    %cst_125 = arith.constant 2.000000e-01 : f32
    %389 = vector.broadcast %cst_125 : f32 to vector<24x24xf32>
    %390 = arith.mulf %389, %386 : vector<24x24xf32>
    %391 = arith.select %388, %386, %390 : vector<24x24xi1>, vector<24x24xf32>
    %cst_126 = arith.constant -1.000000e+30 : f32
    %392 = vector.broadcast %cst_126 : f32 to vector<24x24xf32>
    %393 = arith.select %2, %391, %392 : vector<24x24xi1>, vector<24x24xf32>
    %cst_127 = arith.constant dense<0xFF800000> : vector<24xf32>
    %394 = vector.multi_reduction <maximumf>, %393, %cst_127 [1] : vector<24x24xf32> to vector<24xf32>
    %395 = vector.shape_cast %394 : vector<24xf32> to vector<24x1xf32>
    %396 = vector.broadcast %395 : vector<24x1xf32> to vector<24x24xf32>
    %397 = arith.subf %393, %396 : vector<24x24xf32>
    %398 = math.exp %397 : vector<24x24xf32>
    %cst_128 = arith.constant dense<0.000000e+00> : vector<24xf32>
    %399 = vector.multi_reduction <add>, %398, %cst_128 [1] : vector<24x24xf32> to vector<24xf32>
    %400 = vector.shape_cast %399 : vector<24xf32> to vector<24x1xf32>
    %401 = tpu.reciprocal %400 {approx = true} : vector<24x1xf32> -> vector<24x1xf32>
    %402 = vector.broadcast %401 : vector<24x1xf32> to vector<24x24xf32>
    %403 = arith.mulf %398, %402 : vector<24x24xf32>
    %404 = vector.extract_strided_slice %329 {offsets = [0, 16], sizes = [24, 8], strides = [1, 1]} : vector<24x32xf32> to vector<24x8xf32>
    %cst_129 = arith.constant dense<0.000000e+00> : vector<24x8xf32>
    %405 = tpu.matmul %403, %404, %cst_129 {dimension_numbers = #tpu.dot_dimension_numbers<[1], [0], [0], [1], [0, 0, 1, 1], [], []>} : vector<24x24xf32>, vector<24x8xf32>, vector<24x8xf32> -> vector<24x8xf32>
    %406 = vector.extract_strided_slice %330 {offsets = [0, 3], sizes = [24, 1], strides = [1, 1]} : vector<24x4xf32> to vector<24x1xf32>
    %407 = vector.extract_strided_slice %333 {offsets = [3, 0], sizes = [1, 24], strides = [1, 1]} : vector<4x24xf32> to vector<1x24xf32>
    %408 = vector.broadcast %406 : vector<24x1xf32> to vector<24x24xf32>
    %409 = vector.broadcast %407 : vector<1x24xf32> to vector<24x24xf32>
    %410 = arith.addf %408, %409 : vector<24x24xf32>
    %cst_130 = arith.constant 0.000000e+00 : f32
    %411 = vector.broadcast %cst_130 : f32 to vector<24x24xf32>
    %412 = arith.cmpf ogt, %410, %411 : vector<24x24xf32>
    %cst_131 = arith.constant 2.000000e-01 : f32
    %413 = vector.broadcast %cst_131 : f32 to vector<24x24xf32>
    %414 = arith.mulf %413, %410 : vector<24x24xf32>
    %415 = arith.select %412, %410, %414 : vector<24x24xi1>, vector<24x24xf32>
    %cst_132 = arith.constant -1.000000e+30 : f32
    %416 = vector.broadcast %cst_132 : f32 to vector<24x24xf32>
    %417 = arith.select %2, %415, %416 : vector<24x24xi1>, vector<24x24xf32>
    %cst_133 = arith.constant dense<0xFF800000> : vector<24xf32>
    %418 = vector.multi_reduction <maximumf>, %417, %cst_133 [1] : vector<24x24xf32> to vector<24xf32>
    %419 = vector.shape_cast %418 : vector<24xf32> to vector<24x1xf32>
    %420 = vector.broadcast %419 : vector<24x1xf32> to vector<24x24xf32>
    %421 = arith.subf %417, %420 : vector<24x24xf32>
    %422 = math.exp %421 : vector<24x24xf32>
    %cst_134 = arith.constant dense<0.000000e+00> : vector<24xf32>
    %423 = vector.multi_reduction <add>, %422, %cst_134 [1] : vector<24x24xf32> to vector<24xf32>
    %424 = vector.shape_cast %423 : vector<24xf32> to vector<24x1xf32>
    %425 = tpu.reciprocal %424 {approx = true} : vector<24x1xf32> -> vector<24x1xf32>
    %426 = vector.broadcast %425 : vector<24x1xf32> to vector<24x24xf32>
    %427 = arith.mulf %422, %426 : vector<24x24xf32>
    %428 = vector.extract_strided_slice %329 {offsets = [0, 24], sizes = [24, 8], strides = [1, 1]} : vector<24x32xf32> to vector<24x8xf32>
    %cst_135 = arith.constant dense<0.000000e+00> : vector<24x8xf32>
    %429 = tpu.matmul %427, %428, %cst_135 {dimension_numbers = #tpu.dot_dimension_numbers<[1], [0], [0], [1], [0, 0, 1, 1], [], []>} : vector<24x24xf32>, vector<24x8xf32>, vector<24x8xf32> -> vector<24x8xf32>
    %c10 = arith.constant 10 : index
    %c0_136 = arith.constant 0 : index
    %430 = vector.load %arg3[%c10, %c0_136] : memref<17x32xf32, #tpu.memory_space<vmem>>, vector<1x32xf32>
    %431 = tpu.concatenate %357, %381, %405, %429 in 1 : vector<24x8xf32>, vector<24x8xf32>, vector<24x8xf32>, vector<24x8xf32> -> vector<24x32xf32>
    %432 = vector.broadcast %430 : vector<1x32xf32> to vector<24x32xf32>
    %433 = arith.addf %431, %432 : vector<24x32xf32>
    %cst_137 = arith.constant 0.000000e+00 : f32
    %434 = vector.broadcast %cst_137 : f32 to vector<24x32xf32>
    %435 = arith.maximumf %433, %434 : vector<24x32xf32>
    %c0_138 = arith.constant 0 : index
    %c0_139 = arith.constant 0 : index
    %436 = vector.load %arg2[%c0_138, %c0_139] : memref<2x24xf32, #tpu.memory_space<vmem>>, vector<2x24xf32>
    %cst_140 = arith.constant dense<0.000000e+00> : vector<2x32xf32>
    %437 = tpu.matmul %436, %435, %cst_140 {dimension_numbers = #tpu.dot_dimension_numbers<[1], [0], [0], [1], [0, 0, 1, 1], [], []>} : vector<2x24xf32>, vector<24x32xf32>, vector<2x32xf32> -> vector<2x32xf32>
    %c0_141 = arith.constant 0 : index
    %c0_142 = arith.constant 0 : index
    %438 = vector.load %arg7[%c0_141, %c0_142] : memref<32x36xf32, #tpu.memory_space<vmem>>, vector<32x36xf32>
    %c11 = arith.constant 11 : index
    %c0_143 = arith.constant 0 : index
    %439 = vector.load %arg3[%c11, %c0_143] : memref<17x32xf32, #tpu.memory_space<vmem>>, vector<1x32xf32>
    %c12 = arith.constant 12 : index
    %c0_144 = arith.constant 0 : index
    %440 = vector.load %arg3[%c12, %c0_144] : memref<17x32xf32, #tpu.memory_space<vmem>>, vector<1x32xf32>
    %cst_145 = arith.constant dense<0.000000e+00> : vector<32xf32>
    %441 = vector.multi_reduction <add>, %437, %cst_145 [0] : vector<2x32xf32> to vector<32xf32>
    %442 = vector.shape_cast %441 : vector<32xf32> to vector<1x32xf32>
    %cst_146 = arith.constant 2.000000e+00 : f32
    %443 = vector.broadcast %cst_146 : f32 to vector<1x32xf32>
    %444 = arith.divf %442, %443 : vector<1x32xf32>
    %445 = vector.broadcast %444 : vector<1x32xf32> to vector<2x32xf32>
    %446 = arith.subf %437, %445 : vector<2x32xf32>
    %447 = arith.mulf %446, %446 : vector<2x32xf32>
    %cst_147 = arith.constant dense<0.000000e+00> : vector<32xf32>
    %448 = vector.multi_reduction <add>, %447, %cst_147 [0] : vector<2x32xf32> to vector<32xf32>
    %449 = vector.shape_cast %448 : vector<32xf32> to vector<1x32xf32>
    %cst_148 = arith.constant 2.000000e+00 : f32
    %450 = vector.broadcast %cst_148 : f32 to vector<1x32xf32>
    %451 = arith.divf %449, %450 : vector<1x32xf32>
    %452 = vector.broadcast %444 : vector<1x32xf32> to vector<2x32xf32>
    %453 = arith.subf %437, %452 : vector<2x32xf32>
    %cst_149 = arith.constant 9.99999974E-6 : f32
    %454 = vector.broadcast %cst_149 : f32 to vector<1x32xf32>
    %455 = arith.addf %451, %454 : vector<1x32xf32>
    %456 = math.rsqrt %455 : vector<1x32xf32>
    %457 = vector.broadcast %456 : vector<1x32xf32> to vector<2x32xf32>
    %458 = arith.mulf %453, %457 : vector<2x32xf32>
    %459 = vector.broadcast %439 : vector<1x32xf32> to vector<2x32xf32>
    %460 = arith.mulf %458, %459 : vector<2x32xf32>
    %461 = vector.broadcast %440 : vector<1x32xf32> to vector<2x32xf32>
    %462 = arith.addf %460, %461 : vector<2x32xf32>
    %463 = vector.extract_strided_slice %438 {offsets = [0, 0], sizes = [32, 32], strides = [1, 1]} : vector<32x36xf32> to vector<32x32xf32>
    %cst_150 = arith.constant dense<0.000000e+00> : vector<2x32xf32>
    %464 = tpu.matmul %462, %463, %cst_150 {dimension_numbers = #tpu.dot_dimension_numbers<[1], [0], [0], [1], [0, 0, 1, 1], [], []>} : vector<2x32xf32>, vector<32x32xf32>, vector<2x32xf32> -> vector<2x32xf32>
    %c13 = arith.constant 13 : index
    %c0_151 = arith.constant 0 : index
    %465 = vector.load %arg3[%c13, %c0_151] : memref<17x32xf32, #tpu.memory_space<vmem>>, vector<1x32xf32>
    %466 = vector.broadcast %465 : vector<1x32xf32> to vector<2x32xf32>
    %467 = arith.addf %464, %466 : vector<2x32xf32>
    %cst_152 = arith.constant 0.000000e+00 : f32
    %468 = vector.broadcast %cst_152 : f32 to vector<2x32xf32>
    %469 = arith.maximumf %467, %468 : vector<2x32xf32>
    %c14 = arith.constant 14 : index
    %c0_153 = arith.constant 0 : index
    %470 = vector.load %arg3[%c14, %c0_153] : memref<17x32xf32, #tpu.memory_space<vmem>>, vector<1x32xf32>
    %c15 = arith.constant 15 : index
    %c0_154 = arith.constant 0 : index
    %471 = vector.load %arg3[%c15, %c0_154] : memref<17x32xf32, #tpu.memory_space<vmem>>, vector<1x32xf32>
    %cst_155 = arith.constant dense<0.000000e+00> : vector<32xf32>
    %472 = vector.multi_reduction <add>, %469, %cst_155 [0] : vector<2x32xf32> to vector<32xf32>
    %473 = vector.shape_cast %472 : vector<32xf32> to vector<1x32xf32>
    %cst_156 = arith.constant 2.000000e+00 : f32
    %474 = vector.broadcast %cst_156 : f32 to vector<1x32xf32>
    %475 = arith.divf %473, %474 : vector<1x32xf32>
    %476 = vector.broadcast %475 : vector<1x32xf32> to vector<2x32xf32>
    %477 = arith.subf %469, %476 : vector<2x32xf32>
    %478 = arith.mulf %477, %477 : vector<2x32xf32>
    %cst_157 = arith.constant dense<0.000000e+00> : vector<32xf32>
    %479 = vector.multi_reduction <add>, %478, %cst_157 [0] : vector<2x32xf32> to vector<32xf32>
    %480 = vector.shape_cast %479 : vector<32xf32> to vector<1x32xf32>
    %cst_158 = arith.constant 2.000000e+00 : f32
    %481 = vector.broadcast %cst_158 : f32 to vector<1x32xf32>
    %482 = arith.divf %480, %481 : vector<1x32xf32>
    %483 = vector.broadcast %475 : vector<1x32xf32> to vector<2x32xf32>
    %484 = arith.subf %469, %483 : vector<2x32xf32>
    %cst_159 = arith.constant 9.99999974E-6 : f32
    %485 = vector.broadcast %cst_159 : f32 to vector<1x32xf32>
    %486 = arith.addf %482, %485 : vector<1x32xf32>
    %487 = math.rsqrt %486 : vector<1x32xf32>
    %488 = vector.broadcast %487 : vector<1x32xf32> to vector<2x32xf32>
    %489 = arith.mulf %484, %488 : vector<2x32xf32>
    %490 = vector.broadcast %470 : vector<1x32xf32> to vector<2x32xf32>
    %491 = arith.mulf %489, %490 : vector<2x32xf32>
    %492 = vector.broadcast %471 : vector<1x32xf32> to vector<2x32xf32>
    %493 = arith.addf %491, %492 : vector<2x32xf32>
    %494 = vector.extract_strided_slice %438 {offsets = [0, 32], sizes = [32, 4], strides = [1, 1]} : vector<32x36xf32> to vector<32x4xf32>
    %cst_160 = arith.constant dense<0.000000e+00> : vector<2x4xf32>
    %495 = tpu.matmul %493, %494, %cst_160 {dimension_numbers = #tpu.dot_dimension_numbers<[1], [0], [0], [1], [0, 0, 1, 1], [], []>} : vector<2x32xf32>, vector<32x4xf32>, vector<2x4xf32> -> vector<2x4xf32>
    %c16 = arith.constant 16 : index
    %c0_161 = arith.constant 0 : index
    %496 = vector.load %arg3[%c16, %c0_161] : memref<17x32xf32, #tpu.memory_space<vmem>>, vector<1x32xf32>
    %497 = vector.extract_strided_slice %496 {offsets = [0, 0], sizes = [1, 4], strides = [1, 1]} : vector<1x32xf32> to vector<1x4xf32>
    %498 = vector.broadcast %497 : vector<1x4xf32> to vector<2x4xf32>
    %499 = arith.addf %495, %498 : vector<2x4xf32>
    %cst_162 = arith.constant dense<0xFF800000> : vector<2xf32>
    %500 = vector.multi_reduction <maximumf>, %499, %cst_162 [1] : vector<2x4xf32> to vector<2xf32>
    %501 = vector.shape_cast %500 : vector<2xf32> to vector<2x1xf32>
    %502 = vector.broadcast %501 : vector<2x1xf32> to vector<2x4xf32>
    %503 = arith.subf %499, %502 : vector<2x4xf32>
    %504 = math.exp %503 : vector<2x4xf32>
    %cst_163 = arith.constant dense<0.000000e+00> : vector<2xf32>
    %505 = vector.multi_reduction <add>, %504, %cst_163 [1] : vector<2x4xf32> to vector<2xf32>
    %506 = vector.shape_cast %505 : vector<2xf32> to vector<2x1xf32>
    %507 = math.log %506 : vector<2x1xf32>
    %508 = vector.broadcast %507 : vector<2x1xf32> to vector<2x4xf32>
    %509 = arith.subf %503, %508 : vector<2x4xf32>
    %c0_164 = arith.constant 0 : index
    %c0_165 = arith.constant 0 : index
    %510 = vector.load %arg8[%c0_164, %c0_165] : memref<2x4xf32, #tpu.memory_space<vmem>>, vector<2x4xf32>
    tpu.vector_store %arg8[%c0_164, %c0_165], %509 {strides = array<i32>} : memref<2x4xf32, #tpu.memory_space<vmem>>, vector<2x4xf32>,
    return
  }
}

</mosaic_0001>

<llo_original>
// kernel: tpu_custom_call.1
$region0: #{tpu_custom_call.1}
  #allocation0 [shape = 'u32[]', space=smem, size = 0x4, offset = 0x4, fixed_abs, tag = 'smem constant byte address 0x4 - core index']
  #allocation1 [shape = 'u32[72,128]{1,0:T(1,128)}', space=vmem, size = 0x9000, scoped, tag = 'internal scratch']
  %s0 = inlined_call_operand.vmem [shape: f32[24,16], index: 0, kind: input, shape index: {}]
  %s1 = inlined_call_operand.hbm [shape: f32[24,24], index: 1, kind: input, shape index: {}]
  %s2 = inlined_call_operand.vmem [shape: f32[2,24], index: 2, kind: input, shape index: {}]
  %s3 = inlined_call_operand.hbm [shape: f32[17,32], index: 3, kind: input, shape index: {}]
  %s4 = inlined_call_operand.hbm [shape: f32[16,32], index: 4, kind: input, shape index: {}]
  %s5 = inlined_call_operand.hbm [shape: f32[3,32,36], index: 5, kind: input, shape index: {}]
  %s6 = inlined_call_operand.vmem [shape: f32[3,4,32], index: 6, kind: input, shape index: {}]
  %s7 = inlined_call_operand.vmem [shape: f32[32,36], index: 7, kind: input, shape index: {}]
  %s8 = inlined_call_operand.hbm [shape: f32[2,4], index: 8, kind: output, shape index: {}]
  %s9 = sld [smem:[#allocation0]]
  $region58: #{tpu_custom_call.1} parent=0
    _
  %s11 = ssub.s32 1, %s9
  %s12 = scalar_select 0, %s11, %s9
  $region1: #{tpu_custom_call.1} parent=0
    #allocation2 [shape = 'u8[12288]{0}', space=vmem, size = 0x3000, scoped, tag = 'input window, operand 1, single buffered']
    #allocation3 [shape = 's32[1]{0}', space=sflag, size = 0x4, scoped, tag = 'scoped memory for tpu_custom_call.1']
    #allocation4 [shape = 's32[1]{0}', space=sflag, size = 0x4, scoped, tag = 'scoped memory for tpu_custom_call.1']
    #allocation5 [shape = 'u8[12288]{0}', space=vmem, size = 0x3000, scoped, tag = 'input window, operand 3, single buffered']
    #allocation6 [shape = 's32[1]{0}', space=sflag, size = 0x4, scoped, tag = 'scoped memory for tpu_custom_call.1']
    #allocation7 [shape = 'u8[8192]{0}', space=vmem, size = 0x2000, scoped, tag = 'input window, operand 4, single buffered']
    #allocation8 [shape = 'u8[49152]{0}', space=vmem, size = 0xc000, scoped, tag = 'input window, operand 5, single buffered']
    #allocation9 [shape = 's32[1]{0}', space=sflag, size = 0x4, scoped, tag = 'scoped memory for tpu_custom_call.1']
    #allocation10 [shape = 'u8[1024]{0}', space=vmem, size = 0x400, scoped, tag = 'output window, operand 0, single buffered']
    %13 = vsyncpa [#allocation3], 0
    %14 = vsyncpa [#allocation6], 0
    %15 = vsyncpa [#allocation9], 0
    %16 = vsyncpa [#allocation4], 0
    // Predicated region
    $region2: #{tpu_custom_call.1} parent=1 // pred_check
      _
    $region3: #{tpu_custom_call.1} parent=1 // pred_check_branch
      %18 = sbr.rel (0) target = $region5
    $region4: #{tpu_custom_call.1} parent=1 // pred_region
      _
    $region5: #{tpu_custom_call.1} parent=1 // pred_fallthru
      _
    // Predicated region
    $region6: #{tpu_custom_call.1} parent=1 // pred_check
      _
    $region7: #{tpu_custom_call.1} parent=1 // pred_check_branch
      %20 = sbr.rel (0) target = $region9
    $region8: #{tpu_custom_call.1} parent=1 // pred_region
      %22 = vsyncadd [#allocation3], 0
      %s23 = sshll.u32 %s1, 4
      %s24 = int_to_ptr.hbm [resolvable:$true] %s23
      %s25 = sshll.u32 [#allocation2], 4
      %s26 = int_to_ptr.vmem [resolvable:$true] %s25
      %31 = dma.hbm_to_vmem [thread:$0]  %s24, 384, %s26, [#allocation3], 128, 128, 8
    $region9: #{tpu_custom_call.1} parent=1 // pred_fallthru
      _
    // Predicated region
    $region10: #{tpu_custom_call.1} parent=1 // pred_check
      _
    $region11: #{tpu_custom_call.1} parent=1 // pred_check_branch
      %33 = sbr.rel (0) target = $region13
    $region12: #{tpu_custom_call.1} parent=1 // pred_region
      _
    $region13: #{tpu_custom_call.1} parent=1 // pred_fallthru
      _
    // Predicated region
    $region14: #{tpu_custom_call.1} parent=1 // pred_check
      _
    $region15: #{tpu_custom_call.1} parent=1 // pred_check_branch
      %35 = sbr.rel (0) target = $region17
    $region16: #{tpu_custom_call.1} parent=1 // pred_region
      %37 = vsyncadd [#allocation6], 0
      %s38 = sshll.u32 %s3, 4
      %s39 = int_to_ptr.hbm [resolvable:$true] %s38
      %s40 = sshll.u32 [#allocation5], 4
      %s41 = int_to_ptr.vmem [resolvable:$true] %s40
      %46 = dma.hbm_to_vmem [thread:$0]  %s39, 384, %s41, [#allocation6], 128, 128, 8
    $region17: #{tpu_custom_call.1} parent=1 // pred_fallthru
      _
    // Predicated region
    $region18: #{tpu_custom_call.1} parent=1 // pred_check
      _
    $region19: #{tpu_custom_call.1} parent=1 // pred_check_branch
      %48 = sbr.rel (0) target = $region21
    $region20: #{tpu_custom_call.1} parent=1 // pred_region
      %50 = vsyncadd [#allocation6], 0
      %s51 = sshll.u32 %s4, 4
      %s52 = int_to_ptr.hbm [resolvable:$true] %s51
      %s53 = sshll.u32 [#allocation7], 4
      %s54 = int_to_ptr.vmem [resolvable:$true] %s53
      %59 = dma.hbm_to_vmem [thread:$0]  %s52, 256, %s54, [#allocation6], 128, 128, 8
    $region21: #{tpu_custom_call.1} parent=1 // pred_fallthru
      _
    // Predicated region
    $region22: #{tpu_custom_call.1} parent=1 // pred_check
      _
    $region23: #{tpu_custom_call.1} parent=1 // pred_check_branch
      %61 = sbr.rel (0) target = $region25
    $region24: #{tpu_custom_call.1} parent=1 // pred_region
      %63 = vsyncadd [#allocation9], 0
      %s64 = sshll.u32 %s5, 4
      %s65 = int_to_ptr.hbm [resolvable:$true] %s64
      %s66 = sshll.u32 [#allocation8], 4
      %s67 = int_to_ptr.vmem [resolvable:$true] %s66
      %72 = dma.hbm_to_vmem [thread:$0]  %s65, 1536, %s67, [#allocation9], 128, 128, 8
    $region25: #{tpu_custom_call.1} parent=1 // pred_fallthru
      _
    // Predicated region
    $region26: #{tpu_custom_call.1} parent=1 // pred_check
      _
    $region27: #{tpu_custom_call.1} parent=1 // pred_check_branch
      %74 = sbr.rel (0) target = $region29
    $region28: #{tpu_custom_call.1} parent=1 // pred_region
      _
    $region29: #{tpu_custom_call.1} parent=1 // pred_fallthru
      _
    // Predicated region
    $region30: #{tpu_custom_call.1} parent=1 // pred_check
      _
    $region31: #{tpu_custom_call.1} parent=1 // pred_check_branch
      %76 = sbr.rel (0) target = $region33
    $region32: #{tpu_custom_call.1} parent=1 // pred_region
      _
    $region33: #{tpu_custom_call.1} parent=1 // pred_fallthru
      _
    // Predicated region
    $region34: #{tpu_custom_call.1} parent=1 // pred_check
      _
    $region35: #{tpu_custom_call.1} parent=1 // pred_check_branch
      %78 = sbr.rel (0) target = $region37
    $region36: #{tpu_custom_call.1} parent=1 // pred_region
      %80 = dma.done [#allocation3], 384
    $region37: #{tpu_custom_call.1} parent=1 // pred_fallthru
      _
    // Predicated region
    $region38: #{tpu_custom_call.1} parent=1 // pred_check
      _
    $region39: #{tpu_custom_call.1} parent=1 // pred_check_branch
      %82 = sbr.rel (0) target = $region41
    $region40: #{tpu_custom_call.1} parent=1 // pred_region
      %84 = dma.done [#allocation6], 384
    $region41: #{tpu_custom_call.1} parent=1 // pred_fallthru
      _
    // Predicated region
    $region42: #{tpu_custom_call.1} parent=1 // pred_check
      _
    $region43: #{tpu_custom_call.1} parent=1 // pred_check_branch
      %86 = sbr.rel (0) target = $region45
    $region44: #{tpu_custom_call.1} parent=1 // pred_region
      %88 = dma.done [#allocation6], 256
    $region45: #{tpu_custom_call.1} parent=1 // pred_fallthru
      _
    // Predicated region
    $region46: #{tpu_custom_call.1} parent=1 // pred_check
      _
    $region47: #{tpu_custom_call.1} parent=1 // pred_check_branch
      %90 = sbr.rel (0) target = $region49
    $region48: #{tpu_custom_call.1} parent=1 // pred_region
      %92 = dma.done [#allocation9], 1536
    $region49: #{tpu_custom_call.1} parent=1 // pred_fallthru
      _
    %v93 = vld [vmem:[#allocation2] sm:$0xff]
    %v94 = vld [vmem:[#allocation2 + $0x8] sm:$0xff]
    %v95 = vld [vmem:[#allocation2 + $0x10] sm:$0xff]
    %vm96 = vcmp.gt.f32.partialorder %v93, 0.5
    %vm97 = vcmp.gt.f32.partialorder %v94, 0.5
    %vm98 = vcmp.gt.f32.partialorder %v95, 0.5
    %v99 = vld [vmem:[%s0] sm:$0xff]
    %v100 = vld [vmem:[%s0 + $0x8] sm:$0xff]
    %v101 = vld [vmem:[%s0 + $0x10] sm:$0xff]
    %v102 = vld [vmem:[#allocation5] sm:$0x1]
    %v103 = vld [vmem:[#allocation5 + $0x1] sm:$0x1]
    %vm104 = vcmask 130048
    %v105 = vsel %vm104, %v99, 0.0
    %v106 = vsel %vm104, %v100, 0.0
    %v107 = vadd.f32 %v105, %v106
    %v108 = vsel %vm104, %v101, 0.0
    %v109 = vadd.f32 %v107, %v108
    %v110 = vrot.slane %v109, 4
    %v111 = vadd.f32 %v109, %v110
    %v112 = vrot.slane %v111, 2
    %v113 = vadd.f32 %v111, %v112
    %v114 = vrot.slane %v113, 1
    %v115 = vadd.f32 %v113, %v114
    %v116 = vrcp.pop 24.0
    %v117 = vmul.f32 24.0, %v116
    %v118 = vsub.f32 1.0, %v117
    %v119 = vmul.f32 %v116, %v118
    %v120 = vadd.f32 %v116, %v119
    %vm121 = vweird.f32 %v116
    %v122 = vsel %vm121, %v116, %v120
    %v123 = vmul.f32 %v115, %v122
    %v124 = vsub.f32 %v99, %v123
    %v125 = vsub.f32 %v100, %v123
    %v126 = vsub.f32 %v101, %v123
    %v127 = vmul.f32 %v124, %v124
    %v128 = vmul.f32 %v125, %v125
    %v129 = vmul.f32 %v126, %v126
    %v130 = vsel %vm104, %v127, 0.0
    %v131 = vsel %vm104, %v128, 0.0
    %v132 = vadd.f32 %v130, %v131
    %v133 = vsel %vm104, %v129, 0.0
    %v134 = vadd.f32 %v132, %v133
    %v135 = vrot.slane %v134, 4
    %v136 = vadd.f32 %v134, %v135
    %v137 = vrot.slane %v136, 2
    %v138 = vadd.f32 %v136, %v137
    %v139 = vrot.slane %v138, 1
    %v140 = vadd.f32 %v138, %v139
    %v141 = vmul.f32 %v140, %v122
    %v142 = vadd.f32 %v141, 1e-05
    %v143 = vrsqrt.pop %v142
    %v144 = vmul.f32 %v143, %v142
    %v145 = vmul.f32 %v144, %v143
    %v146 = vmul.f32 0.5, %v145
    %v147 = vsub.f32 1.5, %v146
    %v148 = vmul.f32 %v143, %v147
    %vm149 = vweird.f32 %v142
    %vm150 = vweird.f32 %v143
    %vm151 = vmor %vm149, %vm150
    %v152 = vsel %vm151, %v143, %v148
    %v153 = vmul.f32 %v124, %v152
    %v154 = vmul.f32 %v125, %v152
    %v155 = vmul.f32 %v126, %v152
    %v156 = vperm.slane %v102, 0
    %v157 = vmul.f32 %v153, %v156
    %v158 = vmul.f32 %v154, %v156
    %v159 = vmul.f32 %v155, %v156
    %v160 = vperm.slane %v103, 0
    %v161 = vadd.f32 %v157, %v160
    %v162 = vadd.f32 %v158, %v160
    %v163 = vadd.f32 %v159, %v160
    %v164 = vld [vmem:[#allocation7] sm:$0xff]
    %v165 = vld [vmem:[#allocation7 + $0x8] sm:$0xff]
    %v167 = vsel %vm104, %v161, 0
    %v170 = vsel %vm104, %v162, 0
    %v173 = vsel %vm104, %v163, 0
    %175 = vmatpush.msra.mxu0 0.0
    %176 = vmatpush.msra.mxu0 0.0
    %177 = vmatpush.msra.mxu0 0.0
    %178 = vmatpush.msra.mxu0 0.0
    %179 = vmatpush.msra.mxu0 0.0
    %180 = vmatpush.msra.mxu0 0.0
    %181 = vmatpush.msra.mxu0 0.0
    %182 = vmatpush.msra.mxu0 0.0
    %183 = vmatpush.msra.mxu0 0.0
    %184 = vmatpush.msra.mxu0 0.0
    %185 = vmatpush.msra.mxu0 0.0
    %186 = vmatpush.msra.mxu0 0.0
    %187 = vmatpush.msra.mxu0 0.0
    %188 = vmatpush.msra.mxu0 0.0
    %189 = vmatpush.msra.mxu0 %v165
    %190 = vmatpush.msra.mxu0 %v164
    %191 = vmatmul.f32.gmra.mxu0 %v167
    %v192 = vpop.f32.mrf.mxu0
    %v193 = vadd.f32 0.0, %v192
    %194 = vmatmul.f32.gmra.mxu0 %v170
    %v195 = vpop.f32.mrf.mxu0
    %v196 = vadd.f32 0.0, %v195
    %197 = vmatmul.f32.gmra.mxu0 %v173
    %v198 = vpop.f32.mrf.mxu0
    %v199 = vadd.f32 0.0, %v198
    %200 = vdwg.mxu0
    %v201 = vmax.f32 %v193, 0.0
    %v202 = vmax.f32 %v196, 0.0
    %v203 = vmax.f32 %v199, 0.0
    %v204 = vld [vmem:[#allocation5 + $0x2] sm:$0x1]
    %v205 = vld [vmem:[#allocation5 + $0x5] sm:$0x1]
    %vm206 = vcmask 261120
    %v207 = vsel %vm206, %v201, 0.0
    %v208 = vsel %vm206, %v202, 0.0
    %v209 = vadd.f32 %v207, %v208
    %v210 = vsel %vm206, %v203, 0.0
    %v211 = vadd.f32 %v209, %v210
    %v212 = vrot.slane %v211, 4
    %v213 = vadd.f32 %v211, %v212
    %v214 = vrot.slane %v213, 2
    %v215 = vadd.f32 %v213, %v214
    %v216 = vrot.slane %v215, 1
    %v217 = vadd.f32 %v215, %v216
    %v218 = vmul.f32 %v217, %v122
    %v219 = vsub.f32 %v201, %v218
    %v220 = vsub.f32 %v202, %v218
    %v221 = vsub.f32 %v203, %v218
    %v222 = vmul.f32 %v219, %v219
    %v223 = vmul.f32 %v220, %v220
    %v224 = vmul.f32 %v221, %v221
    %v225 = vsel %vm206, %v222, 0.0
    %v226 = vsel %vm206, %v223, 0.0
    %v227 = vadd.f32 %v225, %v226
    %v228 = vsel %vm206, %v224, 0.0
    %v229 = vadd.f32 %v227, %v228
    %v230 = vrot.slane %v229, 4
    %v231 = vadd.f32 %v229, %v230
    %v232 = vrot.slane %v231, 2
    %v233 = vadd.f32 %v231, %v232
    %v234 = vrot.slane %v233, 1
    %v235 = vadd.f32 %v233, %v234
    %v236 = vmul.f32 %v235, %v122
    %v237 = vadd.f32 %v236, 1e-05
    %v238 = vrsqrt.pop %v237
    %v239 = vmul.f32 %v238, %v237
    %v240 = vmul.f32 %v239, %v238
    %v241 = vmul.f32 0.5, %v240
    %v242 = vsub.f32 1.5, %v241
    %v243 = vmul.f32 %v238, %v242
    %vm244 = vweird.f32 %v237
    %vm245 = vweird.f32 %v238
    %vm246 = vmor %vm244, %vm245
    %v247 = vsel %vm246, %v238, %v243
    %v248 = vmul.f32 %v219, %v247
    %v249 = vmul.f32 %v220, %v247
    %v250 = vmul.f32 %v221, %v247
    %v251 = vperm.slane %v204, 0
    %v252 = vmul.f32 %v248, %v251
    %v253 = vmul.f32 %v249, %v251
    %v254 = vmul.f32 %v250, %v251
    %v255 = vperm.slane %v205, 0
    %v256 = vadd.f32 %v252, %v255
    %v257 = vadd.f32 %v253, %v255
    %v258 = vadd.f32 %v254, %v255
    %v259 = vld [vmem:[#allocation8] sm:$0xff]
    %v260 = vld [vmem:[#allocation8 + $0x8] sm:$0xff]
    %v261 = vld [vmem:[#allocation8 + $0x10] sm:$0xff]
    %v262 = vld [vmem:[#allocation8 + $0x18] sm:$0xff]
    %v264 = vsel %vm206, %v256, 0
    %v267 = vsel %vm206, %v257, 0
    %v270 = vsel %vm206, %v258, 0
    %272 = vmatpush.msra.mxu0 0.0
    %273 = vmatpush.msra.mxu0 0.0
    %274 = vmatpush.msra.mxu0 0.0
    %275 = vmatpush.msra.mxu0 0.0
    %276 = vmatpush.msra.mxu0 0.0
    %277 = vmatpush.msra.mxu0 0.0
    %278 = vmatpush.msra.mxu0 0.0
    %279 = vmatpush.msra.mxu0 0.0
    %280 = vmatpush.msra.mxu0 0.0
    %281 = vmatpush.msra.mxu0 0.0
    %282 = vmatpush.msra.mxu0 0.0
    %283 = vmatpush.msra.mxu0 0.0
    %284 = vmatpush.msra.mxu0 %v262
    %285 = vmatpush.msra.mxu0 %v261
    %286 = vmatpush.msra.mxu0 %v260
    %287 = vmatpush.msra.mxu0 %v259
    %288 = vmatmul.f32.gmra.mxu0 %v264
    %v289 = vpop.f32.mrf.mxu0
    %v290 = vadd.f32 0.0, %v289
    %291 = vmatmul.f32.gmra.mxu0 %v267
    %v292 = vpop.f32.mrf.mxu0
    %v293 = vadd.f32 0.0, %v292
    %294 = vmatmul.f32.gmra.mxu0 %v270
    %v295 = vpop.f32.mrf.mxu0
    %v296 = vadd.f32 0.0, %v295
    %297 = vdwg.mxu0
    %v298 = vld [vmem:[%s6] sm:$0xf]
    %v300 = vsel %vm206, %v298, 0
    %302 = vmatpush.xpose.msra.mxu0 0.0
    %303 = vmatpush.xpose.msra.mxu0 0.0
    %304 = vmatpush.xpose.msra.mxu0 0.0
    %305 = vmatpush.xpose.msra.mxu0 0.0
    %306 = vmatpush.xpose.msra.mxu0 0.0
    %307 = vmatpush.xpose.msra.mxu0 0.0
    %308 = vmatpush.xpose.msra.mxu0 0.0
    %309 = vmatpush.xpose.msra.mxu0 0.0
    %310 = vmatpush.xpose.msra.mxu0 0.0
    %311 = vmatpush.xpose.msra.mxu0 0.0
    %312 = vmatpush.xpose.msra.mxu0 0.0
    %313 = vmatpush.xpose.msra.mxu0 0.0
    %314 = vmatpush.xpose.msra.mxu0 0.0
    %315 = vmatpush.xpose.msra.mxu0 %v270
    %316 = vmatpush.xpose.msra.mxu0 %v267
    %317 = vmatpush.xpose.msra.mxu0 %v264
    %318 = vmatmul.f32.gmra.mxu0 %v300
    %v319 = vpop.f32.mrf.mxu0
    %v320 = vadd.f32 0.0, %v319
    %321 = vdwg.mxu0
    %323 = vset.pattern.permute.xlu0 32
    %324 = vperm.xlu0 %323, %v290
    %v325 = vpop.permute.xlu0 %324
    %328 = vset.pattern.permute.xlu0 32
    %329 = vperm.xlu0 %328, %v293
    %v330 = vpop.permute.xlu0 %329
    %333 = vset.pattern.permute.xlu0 32
    %334 = vperm.xlu0 %333, %v296
    %v335 = vpop.permute.xlu0 %334
    %v337 = vperm.slane %v320, 0
    %v338 = vadd.f32 %v325, %v337
    %v339 = vadd.f32 %v330, %v337
    %v340 = vadd.f32 %v335, %v337
    %vm341 = vcmp.gt.f32.partialorder %v338, 0.0
    %vm342 = vcmp.gt.f32.partialorder %v339, 0.0
    %vm343 = vcmp.gt.f32.partialorder %v340, 0.0
    %v344 = vmul.f32 %v338, 0.2
    %v345 = vmul.f32 %v339, 0.2
    %v346 = vmul.f32 %v340, 0.2
    %v347 = vsel %vm341, %v338, %v344
    %v348 = vsel %vm342, %v339, %v345
    %v349 = vsel %vm343, %v340, %v346
    %v350 = vsel %vm96, %v347, -1e+30
    %v351 = vsel %vm97, %v348, -1e+30
    %v352 = vsel %vm98, %v349, -1e+30
    %vm353 = vcmask 195584
    %v354 = vsel %vm353, %v350, -inf
    %355 = vmax.xlane.f32.xlu0 %v354
    %v356 = vpop.xlane.xlu0 %355
    %v357 = vsel %vm353, %v351, -inf
    %358 = vmax.xlane.f32.xlu0 %v357
    %v359 = vpop.xlane.xlu0 %358
    %v360 = vsel %vm353, %v352, -inf
    %361 = vmax.xlane.f32.xlu0 %v360
    %v362 = vpop.xlane.xlu0 %361
    %v363 = vsub.f32 %v350, %v356
    %v364 = vsub.f32 %v351, %v359
    %v365 = vsub.f32 %v352, %v362
    %v366 = vmul.f32 %v363, 1.442695
    %v367 = vpow.pop %v366
    %v368 = vmul.f32 %v364, 1.442695
    %v369 = vpow.pop %v368
    %v370 = vmul.f32 %v365, 1.442695
    %v371 = vpow.pop %v370
    %v372 = vsel %vm353, %v367, 0.0
    %373 = vadd.xlane.f32.xlu0 %v372
    %v374 = vpop.xlane.xlu0 %373
    %v375 = vsel %vm353, %v369, 0.0
    %376 = vadd.xlane.f32.xlu0 %v375
    %v377 = vpop.xlane.xlu0 %376
    %v378 = vsel %vm353, %v371, 0.0
    %379 = vadd.xlane.f32.xlu0 %v378
    %v380 = vpop.xlane.xlu0 %379
    %v381 = vrcp.pop %v374
    %v382 = vrcp.pop %v377
    %v383 = vrcp.pop %v380
    %v384 = vmul.f32 %v367, %v381
    %v385 = vmul.f32 %v369, %v382
    %v386 = vmul.f32 %v371, %v383
    %v388 = vsel %vm353, %v384, 0
    %v391 = vsel %vm353, %v385, 0
    %v394 = vsel %vm353, %v386, 0
    %396 = vmatpush.msra.mxu0 0.0
    %397 = vmatpush.msra.mxu0 0.0
    %398 = vmatpush.msra.mxu0 0.0
    %399 = vmatpush.msra.mxu0 0.0
    %400 = vmatpush.msra.mxu0 0.0
    %401 = vmatpush.msra.mxu0 0.0
    %402 = vmatpush.msra.mxu0 0.0
    %403 = vmatpush.msra.mxu0 0.0
    %404 = vmatpush.msra.mxu0 0.0
    %405 = vmatpush.msra.mxu0 0.0
    %406 = vmatpush.msra.mxu0 0.0
    %407 = vmatpush.msra.mxu0 0.0
    %408 = vmatpush.msra.mxu0 0.0
    %409 = vmatpush.msra.mxu0 %v296
    %410 = vmatpush.msra.mxu0 %v293
    %411 = vmatpush.msra.mxu0 %v290
    %412 = vmatmul.f32.gmra.mxu0 %v388
    %v413 = vpop.f32.mrf.mxu0
    %v414 = vadd.f32 0.0, %v413
    %415 = vmatmul.f32.gmra.mxu0 %v391
    %v416 = vpop.f32.mrf.mxu0
    %v417 = vadd.f32 0.0, %v416
    %418 = vmatmul.f32.gmra.mxu0 %v394
    %v419 = vpop.f32.mrf.mxu0
    %v420 = vadd.f32 0.0, %v419
    %421 = vdwg.mxu0
    %422 = vset.pattern.permute.xlu0 33
    %423 = vperm.xlu0 %422, %v290
    %v424 = vpop.permute.xlu0 %423
    %426 = vset.pattern.permute.xlu0 33
    %427 = vperm.xlu0 %426, %v293
    %v428 = vpop.permute.xlu0 %427
    %430 = vset.pattern.permute.xlu0 33
    %431 = vperm.xlu0 %430, %v296
    %v432 = vpop.permute.xlu0 %431
    %v434 = vperm.slane %v320, 1
    %v435 = vadd.f32 %v424, %v434
    %v436 = vadd.f32 %v428, %v434
    %v437 = vadd.f32 %v432, %v434
    %vm438 = vcmp.gt.f32.partialorder %v435, 0.0
    %vm439 = vcmp.gt.f32.partialorder %v436, 0.0
    %vm440 = vcmp.gt.f32.partialorder %v437, 0.0
    %v441 = vmul.f32 %v435, 0.2
    %v442 = vmul.f32 %v436, 0.2
    %v443 = vmul.f32 %v437, 0.2
    %v444 = vsel %vm438, %v435, %v441
    %v445 = vsel %vm439, %v436, %v442
    %v446 = vsel %vm440, %v437, %v443
    %v447 = vsel %vm96, %v444, -1e+30
    %v448 = vsel %vm97, %v445, -1e+30
    %v449 = vsel %vm98, %v446, -1e+30
    %v450 = vsel %vm353, %v447, -inf
    %451 = vmax.xlane.f32.xlu0 %v450
    %v452 = vpop.xlane.xlu0 %451
    %v453 = vsel %vm353, %v448, -inf
    %454 = vmax.xlane.f32.xlu0 %v453
    %v455 = vpop.xlane.xlu0 %454
    %v456 = vsel %vm353, %v449, -inf
    %457 = vmax.xlane.f32.xlu0 %v456
    %v458 = vpop.xlane.xlu0 %457
    %v459 = vsub.f32 %v447, %v452
    %v460 = vsub.f32 %v448, %v455
    %v461 = vsub.f32 %v449, %v458
    %v462 = vmul.f32 %v459, 1.442695
    %v463 = vpow.pop %v462
    %v464 = vmul.f32 %v460, 1.442695
    %v465 = vpow.pop %v464
    %v466 = vmul.f32 %v461, 1.442695
    %v467 = vpow.pop %v466
    %v468 = vsel %vm353, %v463, 0.0
    %469 = vadd.xlane.f32.xlu0 %v468
    %v470 = vpop.xlane.xlu0 %469
    %v471 = vsel %vm353, %v465, 0.0
    %472 = vadd.xlane.f32.xlu0 %v471
    %v473 = vpop.xlane.xlu0 %472
    %v474 = vsel %vm353, %v467, 0.0
    %475 = vadd.xlane.f32.xlu0 %v474
    %v476 = vpop.xlane.xlu0 %475
    %v477 = vrcp.pop %v470
    %v478 = vrcp.pop %v473
    %v479 = vrcp.pop %v476
    %v480 = vmul.f32 %v463, %v477
    %v481 = vmul.f32 %v465, %v478
    %v482 = vmul.f32 %v467, %v479
    %483 = vrot.lane.b32.xlu0 %v290, 120
    %v484 = vpop.permute.xlu0 %483
    %485 = vrot.lane.b32.xlu0 %v293, 120
    %v486 = vpop.permute.xlu0 %485
    %487 = vrot.lane.b32.xlu0 %v296, 120
    %v488 = vpop.permute.xlu0 %487
    %v493 = vsel %vm353, %v480, 0
    %v496 = vsel %vm353, %v481, 0
    %v499 = vsel %vm353, %v482, 0
    %501 = vmatpush.msra.mxu0 0.0
    %502 = vmatpush.msra.mxu0 0.0
    %503 = vmatpush.msra.mxu0 0.0
    %504 = vmatpush.msra.mxu0 0.0
    %505 = vmatpush.msra.mxu0 0.0
    %506 = vmatpush.msra.mxu0 0.0
    %507 = vmatpush.msra.mxu0 0.0
    %508 = vmatpush.msra.mxu0 0.0
    %509 = vmatpush.msra.mxu0 0.0
    %510 = vmatpush.msra.mxu0 0.0
    %511 = vmatpush.msra.mxu0 0.0
    %512 = vmatpush.msra.mxu0 0.0
    %513 = vmatpush.msra.mxu0 0.0
    %514 = vmatpush.msra.mxu0 %v488
    %515 = vmatpush.msra.mxu0 %v486
    %516 = vmatpush.msra.mxu0 %v484
    %517 = vmatmul.f32.gmra.mxu0 %v493
    %v518 = vpop.f32.mrf.mxu0
    %v519 = vadd.f32 0.0, %v518
    %520 = vmatmul.f32.gmra.mxu0 %v496
    %v521 = vpop.f32.mrf.mxu0
    %v522 = vadd.f32 0.0, %v521
    %523 = vmatmul.f32.gmra.mxu0 %v499
    %v524 = vpop.f32.mrf.mxu0
    %v525 = vadd.f32 0.0, %v524
    %526 = vdwg.mxu0
    %527 = vset.pattern.permute.xlu0 34
    %528 = vperm.xlu0 %527, %v290
    %v529 = vpop.permute.xlu0 %528
    %531 = vset.pattern.permute.xlu0 34
    %532 = vperm.xlu0 %531, %v293
    %v533 = vpop.permute.xlu0 %532
    %535 = vset.pattern.permute.xlu0 34
    %536 = vperm.xlu0 %535, %v296
    %v537 = vpop.permute.xlu0 %536
    %v539 = vperm.slane %v320, 2
    %v540 = vadd.f32 %v529, %v539
    %v541 = vadd.f32 %v533, %v539
    %v542 = vadd.f32 %v537, %v539
    %vm543 = vcmp.gt.f32.partialorder %v540, 0.0
    %vm544 = vcmp.gt.f32.partialorder %v541, 0.0
    %vm545 = vcmp.gt.f32.partialorder %v542, 0.0
    %v546 = vmul.f32 %v540, 0.2
    %v547 = vmul.f32 %v541, 0.2
    %v548 = vmul.f32 %v542, 0.2
    %v549 = vsel %vm543, %v540, %v546
    %v550 = vsel %vm544, %v541, %v547
    %v551 = vsel %vm545, %v542, %v548
    %v552 = vsel %vm96, %v549, -1e+30
    %v553 = vsel %vm97, %v550, -1e+30
    %v554 = vsel %vm98, %v551, -1e+30
    %v555 = vsel %vm353, %v552, -inf
    %556 = vmax.xlane.f32.xlu0 %v555
    %v557 = vpop.xlane.xlu0 %556
    %v558 = vsel %vm353, %v553, -inf
    %559 = vmax.xlane.f32.xlu0 %v558
    %v560 = vpop.xlane.xlu0 %559
    %v561 = vsel %vm353, %v554, -inf
    %562 = vmax.xlane.f32.xlu0 %v561
    %v563 = vpop.xlane.xlu0 %562
    %v564 = vsub.f32 %v552, %v557
    %v565 = vsub.f32 %v553, %v560
    %v566 = vsub.f32 %v554, %v563
    %v567 = vmul.f32 %v564, 1.442695
    %v568 = vpow.pop %v567
    %v569 = vmul.f32 %v565, 1.442695
    %v570 = vpow.pop %v569
    %v571 = vmul.f32 %v566, 1.442695
    %v572 = vpow.pop %v571
    %v573 = vsel %vm353, %v568, 0.0
    %574 = vadd.xlane.f32.xlu0 %v573
    %v575 = vpop.xlane.xlu0 %574
    %v576 = vsel %vm353, %v570, 0.0
    %577 = vadd.xlane.f32.xlu0 %v576
    %v578 = vpop.xlane.xlu0 %577
    %v579 = vsel %vm353, %v572, 0.0
    %580 = vadd.xlane.f32.xlu0 %v579
    %v581 = vpop.xlane.xlu0 %580
    %v582 = vrcp.pop %v575
    %v583 = vrcp.pop %v578
    %v584 = vrcp.pop %v581
    %v585 = vmul.f32 %v568, %v582
    %v586 = vmul.f32 %v570, %v583
    %v587 = vmul.f32 %v572, %v584
    %588 = vrot.lane.b32.xlu0 %v290, 112
    %v589 = vpop.permute.xlu0 %588
    %590 = vrot.lane.b32.xlu0 %v293, 112
    %v591 = vpop.permute.xlu0 %590
    %592 = vrot.lane.b32.xlu0 %v296, 112
    %v593 = vpop.permute.xlu0 %592
    %v598 = vsel %vm353, %v585, 0
    %v601 = vsel %vm353, %v586, 0
    %v604 = vsel %vm353, %v587, 0
    %606 = vmatpush.msra.mxu0 0.0
    %607 = vmatpush.msra.mxu0 0.0
    %608 = vmatpush.msra.mxu0 0.0
    %609 = vmatpush.msra.mxu0 0.0
    %610 = vmatpush.msra.mxu0 0.0
    %611 = vmatpush.msra.mxu0 0.0
    %612 = vmatpush.msra.mxu0 0.0
    %613 = vmatpush.msra.mxu0 0.0
    %614 = vmatpush.msra.mxu0 0.0
    %615 = vmatpush.msra.mxu0 0.0
    %616 = vmatpush.msra.mxu0 0.0
    %617 = vmatpush.msra.mxu0 0.0
    %618 = vmatpush.msra.mxu0 0.0
    %619 = vmatpush.msra.mxu0 %v593
    %620 = vmatpush.msra.mxu0 %v591
    %621 = vmatpush.msra.mxu0 %v589
    %622 = vmatmul.f32.gmra.mxu0 %v598
    %v623 = vpop.f32.mrf.mxu0
    %v624 = vadd.f32 0.0, %v623
    %625 = vmatmul.f32.gmra.mxu0 %v601
    %v626 = vpop.f32.mrf.mxu0
    %v627 = vadd.f32 0.0, %v626
    %628 = vmatmul.f32.gmra.mxu0 %v604
    %v629 = vpop.f32.mrf.mxu0
    %v630 = vadd.f32 0.0, %v629
    %631 = vdwg.mxu0
    %632 = vset.pattern.permute.xlu0 35
    %633 = vperm.xlu0 %632, %v290
    %v634 = vpop.permute.xlu0 %633
    %636 = vset.pattern.permute.xlu0 35
    %637 = vperm.xlu0 %636, %v293
    %v638 = vpop.permute.xlu0 %637
    %640 = vset.pattern.permute.xlu0 35
    %641 = vperm.xlu0 %640, %v296
    %v642 = vpop.permute.xlu0 %641
    %v644 = vperm.slane %v320, 3
    %v645 = vadd.f32 %v634, %v644
    %v646 = vadd.f32 %v638, %v644
    %v647 = vadd.f32 %v642, %v644
    %vm648 = vcmp.gt.f32.partialorder %v645, 0.0
    %vm649 = vcmp.gt.f32.partialorder %v646, 0.0
    %vm650 = vcmp.gt.f32.partialorder %v647, 0.0
    %v651 = vmul.f32 %v645, 0.2
    %v652 = vmul.f32 %v646, 0.2
    %v653 = vmul.f32 %v647, 0.2
    %v654 = vsel %vm648, %v645, %v651
    %v655 = vsel %vm649, %v646, %v652
    %v656 = vsel %vm650, %v647, %v653
    %v657 = vsel %vm96, %v654, -1e+30
    %v658 = vsel %vm97, %v655, -1e+30
    %v659 = vsel %vm98, %v656, -1e+30
    %v660 = vsel %vm353, %v657, -inf
    %661 = vmax.xlane.f32.xlu0 %v660
    %v662 = vpop.xlane.xlu0 %661
    %v663 = vsel %vm353, %v658, -inf
    %664 = vmax.xlane.f32.xlu0 %v663
    %v665 = vpop.xlane.xlu0 %664
    %v666 = vsel %vm353, %v659, -inf
    %667 = vmax.xlane.f32.xlu0 %v666
    %v668 = vpop.xlane.xlu0 %667
    %v669 = vsub.f32 %v657, %v662
    %v670 = vsub.f32 %v658, %v665
    %v671 = vsub.f32 %v659, %v668
    %v672 = vmul.f32 %v669, 1.442695
    %v673 = vpow.pop %v672
    %v674 = vmul.f32 %v670, 1.442695
    %v675 = vpow.pop %v674
    %v676 = vmul.f32 %v671, 1.442695
    %v677 = vpow.pop %v676
    %v678 = vsel %vm353, %v673, 0.0
    %679 = vadd.xlane.f32.xlu0 %v678
    %v680 = vpop.xlane.xlu0 %679
    %v681 = vsel %vm353, %v675, 0.0
    %682 = vadd.xlane.f32.xlu0 %v681
    %v683 = vpop.xlane.xlu0 %682
    %v684 = vsel %vm353, %v677, 0.0
    %685 = vadd.xlane.f32.xlu0 %v684
    %v686 = vpop.xlane.xlu0 %685
    %v687 = vrcp.pop %v680
    %v688 = vrcp.pop %v683
    %v689 = vrcp.pop %v686
    %v690 = vmul.f32 %v673, %v687
    %v691 = vmul.f32 %v675, %v688
    %v692 = vmul.f32 %v677, %v689
    %693 = vrot.lane.b32.xlu0 %v290, 104
    %v694 = vpop.permute.xlu0 %693
    %695 = vrot.lane.b32.xlu0 %v293, 104
    %v696 = vpop.permute.xlu0 %695
    %697 = vrot.lane.b32.xlu0 %v296, 104
    %v698 = vpop.permute.xlu0 %697
    %v703 = vsel %vm353, %v690, 0
    %v706 = vsel %vm353, %v691, 0
    %v709 = vsel %vm353, %v692, 0
    %711 = vmatpush.msra.mxu0 0.0
    %712 = vmatpush.msra.mxu0 0.0
    %713 = vmatpush.msra.mxu0 0.0
    %714 = vmatpush.msra.mxu0 0.0
    %715 = vmatpush.msra.mxu0 0.0
    %716 = vmatpush.msra.mxu0 0.0
    %717 = vmatpush.msra.mxu0 0.0
    %718 = vmatpush.msra.mxu0 0.0
    %719 = vmatpush.msra.mxu0 0.0
    %720 = vmatpush.msra.mxu0 0.0
    %721 = vmatpush.msra.mxu0 0.0
    %722 = vmatpush.msra.mxu0 0.0
    %723 = vmatpush.msra.mxu0 0.0
    %724 = vmatpush.msra.mxu0 %v698
    %725 = vmatpush.msra.mxu0 %v696
    %726 = vmatpush.msra.mxu0 %v694
    %727 = vmatmul.f32.gmra.mxu0 %v703
    %v728 = vpop.f32.mrf.mxu0
    %v729 = vadd.f32 0.0, %v728
    %730 = vmatmul.f32.gmra.mxu0 %v706
    %v731 = vpop.f32.mrf.mxu0
    %v732 = vadd.f32 0.0, %v731
    %733 = vmatmul.f32.gmra.mxu0 %v709
    %v734 = vpop.f32.mrf.mxu0
    %v735 = vadd.f32 0.0, %v734
    %736 = vdwg.mxu0
    %v737 = vld [vmem:[#allocation5 + $0x8] sm:$0x1]
    %741 = vrot.lane.b32.xlu0 %v519, 8
    %v742 = vpop.permute.xlu0 %741
    %743 = vrot.lane.b32.xlu0 %v522, 8
    %v744 = vpop.permute.xlu0 %743
    %745 = vrot.lane.b32.xlu0 %v525, 8
    %v746 = vpop.permute.xlu0 %745
    %753 = vrot.lane.b32.xlu0 %v624, 16
    %v754 = vpop.permute.xlu0 %753
    %755 = vrot.lane.b32.xlu0 %v627, 16
    %v756 = vpop.permute.xlu0 %755
    %757 = vrot.lane.b32.xlu0 %v630, 16
    %v758 = vpop.permute.xlu0 %757
    %765 = vrot.lane.b32.xlu0 %v729, 24
    %v766 = vpop.permute.xlu0 %765
    %767 = vrot.lane.b32.xlu0 %v732, 24
    %v768 = vpop.permute.xlu0 %767
    %769 = vrot.lane.b32.xlu0 %v735, 24
    %v770 = vpop.permute.xlu0 %769
    %vm774 = vcmask 64512
    %v775 = vsel %vm774, %v414, %v742
    %v776 = vsel %vm774, %v417, %v744
    %v777 = vsel %vm774, %v420, %v746
    %v778 = vsel %vm104, %v775, %v754
    %v779 = vsel %vm104, %v776, %v756
    %v780 = vsel %vm104, %v777, %v758
    %v781 = vsel %vm353, %v778, %v766
    %v782 = vsel %vm353, %v779, %v768
    %v783 = vsel %vm353, %v780, %v770
    %v784 = vperm.slane %v737, 0
    %v785 = vadd.f32 %v781, %v784
    %v786 = vadd.f32 %v782, %v784
    %v787 = vadd.f32 %v783, %v784
    %v788 = vmax.f32 %v785, 0.0
    %v789 = vmax.f32 %v786, 0.0
    %v790 = vmax.f32 %v787, 0.0
    %v791 = vld [vmem:[#allocation5 + $0x3] sm:$0x1]
    %v792 = vld [vmem:[#allocation5 + $0x6] sm:$0x1]
    %v793 = vsel %vm206, %v788, 0.0
    %v794 = vsel %vm206, %v789, 0.0
    %v795 = vadd.f32 %v793, %v794
    %v796 = vsel %vm206, %v790, 0.0
    %v797 = vadd.f32 %v795, %v796
    %v798 = vrot.slane %v797, 4
    %v799 = vadd.f32 %v797, %v798
    %v800 = vrot.slane %v799, 2
    %v801 = vadd.f32 %v799, %v800
    %v802 = vrot.slane %v801, 1
    %v803 = vadd.f32 %v801, %v802
    %v804 = vmul.f32 %v803, %v122
    %v805 = vsub.f32 %v788, %v804
    %v806 = vsub.f32 %v789, %v804
    %v807 = vsub.f32 %v790, %v804
    %v808 = vmul.f32 %v805, %v805
    %v809 = vmul.f32 %v806, %v806
    %v810 = vmul.f32 %v807, %v807
    %v811 = vsel %vm206, %v808, 0.0
    %v812 = vsel %vm206, %v809, 0.0
    %v813 = vadd.f32 %v811, %v812
    %v814 = vsel %vm206, %v810, 0.0
    %v815 = vadd.f32 %v813, %v814
    %v816 = vrot.slane %v815, 4
    %v817 = vadd.f32 %v815, %v816
    %v818 = vrot.slane %v817, 2
    %v819 = vadd.f32 %v817, %v818
    %v820 = vrot.slane %v819, 1
    %v821 = vadd.f32 %v819, %v820
    %v822 = vmul.f32 %v821, %v122
    %v823 = vadd.f32 %v822, 1e-05
    %v824 = vrsqrt.pop %v823
    %v825 = vmul.f32 %v824, %v823
    %v826 = vmul.f32 %v825, %v824
    %v827 = vmul.f32 0.5, %v826
    %v828 = vsub.f32 1.5, %v827
    %v829 = vmul.f32 %v824, %v828
    %vm830 = vweird.f32 %v823
    %vm831 = vweird.f32 %v824
    %vm832 = vmor %vm830, %vm831
    %v833 = vsel %vm832, %v824, %v829
    %v834 = vmul.f32 %v805, %v833
    %v835 = vmul.f32 %v806, %v833
    %v836 = vmul.f32 %v807, %v833
    %v837 = vperm.slane %v791, 0
    %v838 = vmul.f32 %v834, %v837
    %v839 = vmul.f32 %v835, %v837
    %v840 = vmul.f32 %v836, %v837
    %v841 = vperm.slane %v792, 0
    %v842 = vadd.f32 %v838, %v841
    %v843 = vadd.f32 %v839, %v841
    %v844 = vadd.f32 %v840, %v841
    %s845 = scalar_lea.vmem [#allocation8], 32
    %v846 = vld [vmem:[%s845] sm:$0xff]
    %v847 = vld [vmem:[%s845 + $0x8] sm:$0xff]
    %v848 = vld [vmem:[%s845 + $0x10] sm:$0xff]
    %v849 = vld [vmem:[%s845 + $0x18] sm:$0xff]
    %v851 = vsel %vm206, %v842, 0
    %v854 = vsel %vm206, %v843, 0
    %v857 = vsel %vm206, %v844, 0
    %859 = vmatpush.msra.mxu0 0.0
    %860 = vmatpush.msra.mxu0 0.0
    %861 = vmatpush.msra.mxu0 0.0
    %862 = vmatpush.msra.mxu0 0.0
    %863 = vmatpush.msra.mxu0 0.0
    %864 = vmatpush.msra.mxu0 0.0
    %865 = vmatpush.msra.mxu0 0.0
    %866 = vmatpush.msra.mxu0 0.0
    %867 = vmatpush.msra.mxu0 0.0
    %868 = vmatpush.msra.mxu0 0.0
    %869 = vmatpush.msra.mxu0 0.0
    %870 = vmatpush.msra.mxu0 0.0
    %871 = vmatpush.msra.mxu0 %v849
    %872 = vmatpush.msra.mxu0 %v848
    %873 = vmatpush.msra.mxu0 %v847
    %874 = vmatpush.msra.mxu0 %v846
    %875 = vmatmul.f32.gmra.mxu0 %v851
    %v876 = vpop.f32.mrf.mxu0
    %v877 = vadd.f32 0.0, %v876
    %878 = vmatmul.f32.gmra.mxu0 %v854
    %v879 = vpop.f32.mrf.mxu0
    %v880 = vadd.f32 0.0, %v879
    %881 = vmatmul.f32.gmra.mxu0 %v857
    %v882 = vpop.f32.mrf.mxu0
    %v883 = vadd.f32 0.0, %v882
    %884 = vdwg.mxu0
    %s885 = scalar_lea.vmem %s6, 4
    %v886 = vld [vmem:[%s885] sm:$0xf]
    %v888 = vsel %vm206, %v886, 0
    %890 = vmatpush.xpose.msra.mxu0 0.0
    %891 = vmatpush.xpose.msra.mxu0 0.0
    %892 = vmatpush.xpose.msra.mxu0 0.0
    %893 = vmatpush.xpose.msra.mxu0 0.0
    %894 = vmatpush.xpose.msra.mxu0 0.0
    %895 = vmatpush.xpose.msra.mxu0 0.0
    %896 = vmatpush.xpose.msra.mxu0 0.0
    %897 = vmatpush.xpose.msra.mxu0 0.0
    %898 = vmatpush.xpose.msra.mxu0 0.0
    %899 = vmatpush.xpose.msra.mxu0 0.0
    %900 = vmatpush.xpose.msra.mxu0 0.0
    %901 = vmatpush.xpose.msra.mxu0 0.0
    %902 = vmatpush.xpose.msra.mxu0 0.0
    %903 = vmatpush.xpose.msra.mxu0 %v857
    %904 = vmatpush.xpose.msra.mxu0 %v854
    %905 = vmatpush.xpose.msra.mxu0 %v851
    %906 = vmatmul.f32.gmra.mxu0 %v888
    %v907 = vpop.f32.mrf.mxu0
    %v908 = vadd.f32 0.0, %v907
    %909 = vdwg.mxu0
    %911 = vset.pattern.permute.xlu0 32
    %912 = vperm.xlu0 %911, %v877
    %v913 = vpop.permute.xlu0 %912
    %916 = vset.pattern.permute.xlu0 32
    %917 = vperm.xlu0 %916, %v880
    %v918 = vpop.permute.xlu0 %917
    %921 = vset.pattern.permute.xlu0 32
    %922 = vperm.xlu0 %921, %v883
    %v923 = vpop.permute.xlu0 %922
    %v925 = vperm.slane %v908, 0
    %v926 = vadd.f32 %v913, %v925
    %v927 = vadd.f32 %v918, %v925
    %v928 = vadd.f32 %v923, %v925
    %vm929 = vcmp.gt.f32.partialorder %v926, 0.0
    %vm930 = vcmp.gt.f32.partialorder %v927, 0.0
    %vm931 = vcmp.gt.f32.partialorder %v928, 0.0
    %v932 = vmul.f32 %v926, 0.2
    %v933 = vmul.f32 %v927, 0.2
    %v934 = vmul.f32 %v928, 0.2
    %v935 = vsel %vm929, %v926, %v932
    %v936 = vsel %vm930, %v927, %v933
    %v937 = vsel %vm931, %v928, %v934
    %v938 = vsel %vm96, %v935, -1e+30
    %v939 = vsel %vm97, %v936, -1e+30
    %v940 = vsel %vm98, %v937, -1e+30
    %v941 = vsel %vm353, %v938, -inf
    %942 = vmax.xlane.f32.xlu0 %v941
    %v943 = vpop.xlane.xlu0 %942
    %v944 = vsel %vm353, %v939, -inf
    %945 = vmax.xlane.f32.xlu0 %v944
    %v946 = vpop.xlane.xlu0 %945
    %v947 = vsel %vm353, %v940, -inf
    %948 = vmax.xlane.f32.xlu0 %v947
    %v949 = vpop.xlane.xlu0 %948
    %v950 = vsub.f32 %v938, %v943
    %v951 = vsub.f32 %v939, %v946
    %v952 = vsub.f32 %v940, %v949
    %v953 = vmul.f32 %v950, 1.442695
    %v954 = vpow.pop %v953
    %v955 = vmul.f32 %v951, 1.442695
    %v956 = vpow.pop %v955
    %v957 = vmul.f32 %v952, 1.442695
    %v958 = vpow.pop %v957
    %v959 = vsel %vm353, %v954, 0.0
    %960 = vadd.xlane.f32.xlu0 %v959
    %v961 = vpop.xlane.xlu0 %960
    %v962 = vsel %vm353, %v956, 0.0
    %963 = vadd.xlane.f32.xlu0 %v962
    %v964 = vpop.xlane.xlu0 %963
    %v965 = vsel %vm353, %v958, 0.0
    %966 = vadd.xlane.f32.xlu0 %v965
    %v967 = vpop.xlane.xlu0 %966
    %v968 = vrcp.pop %v961
    %v969 = vrcp.pop %v964
    %v970 = vrcp.pop %v967
    %v971 = vmul.f32 %v954, %v968
    %v972 = vmul.f32 %v956, %v969
    %v973 = vmul.f32 %v958, %v970
    %v975 = vsel %vm353, %v971, 0
    %v978 = vsel %vm353, %v972, 0
    %v981 = vsel %vm353, %v973, 0
    %983 = vmatpush.msra.mxu0 0.0
    %984 = vmatpush.msra.mxu0 0.0
    %985 = vmatpush.msra.mxu0 0.0
    %986 = vmatpush.msra.mxu0 0.0
    %987 = vmatpush.msra.mxu0 0.0
    %988 = vmatpush.msra.mxu0 0.0
    %989 = vmatpush.msra.mxu0 0.0
    %990 = vmatpush.msra.mxu0 0.0
    %991 = vmatpush.msra.mxu0 0.0
    %992 = vmatpush.msra.mxu0 0.0
    %993 = vmatpush.msra.mxu0 0.0
    %994 = vmatpush.msra.mxu0 0.0
    %995 = vmatpush.msra.mxu0 0.0
    %996 = vmatpush.msra.mxu0 %v883
    %997 = vmatpush.msra.mxu0 %v880
    %998 = vmatpush.msra.mxu0 %v877
    %999 = vmatmul.f32.gmra.mxu0 %v975
    %v1000 = vpop.f32.mrf.mxu0
    %v1001 = vadd.f32 0.0, %v1000
    %1002 = vmatmul.f32.gmra.mxu0 %v978
    %v1003 = vpop.f32.mrf.mxu0
    %v1004 = vadd.f32 0.0, %v1003
    %1005 = vmatmul.f32.gmra.mxu0 %v981
    %v1006 = vpop.f32.mrf.mxu0
    %v1007 = vadd.f32 0.0, %v1006
    %1008 = vdwg.mxu0
    %1009 = vset.pattern.permute.xlu0 33
    %1010 = vperm.xlu0 %1009, %v877
    %v1011 = vpop.permute.xlu0 %1010
    %1013 = vset.pattern.permute.xlu0 33
    %1014 = vperm.xlu0 %1013, %v880
    %v1015 = vpop.permute.xlu0 %1014
    %1017 = vset.pattern.permute.xlu0 33
    %1018 = vperm.xlu0 %1017, %v883
    %v1019 = vpop.permute.xlu0 %1018
    %v1021 = vperm.slane %v908, 1
    %v1022 = vadd.f32 %v1011, %v1021
    %v1023 = vadd.f32 %v1015, %v1021
    %v1024 = vadd.f32 %v1019, %v1021
    %vm1025 = vcmp.gt.f32.partialorder %v1022, 0.0
    %vm1026 = vcmp.gt.f32.partialorder %v1023, 0.0
    %vm1027 = vcmp.gt.f32.partialorder %v1024, 0.0
    %v1028 = vmul.f32 %v1022, 0.2
    %v1029 = vmul.f32 %v1023, 0.2
    %v1030 = vmul.f32 %v1024, 0.2
    %v1031 = vsel %vm1025, %v1022, %v1028
    %v1032 = vsel %vm1026, %v1023, %v1029
    %v1033 = vsel %vm1027, %v1024, %v1030
    %v1034 = vsel %vm96, %v1031, -1e+30
    %v1035 = vsel %vm97, %v1032, -1e+30
    %v1036 = vsel %vm98, %v1033, -1e+30
    %v1037 = vsel %vm353, %v1034, -inf
    %1038 = vmax.xlane.f32.xlu0 %v1037
    %v1039 = vpop.xlane.xlu0 %1038
    %v1040 = vsel %vm353, %v1035, -inf
    %1041 = vmax.xlane.f32.xlu0 %v1040
    %v1042 = vpop.xlane.xlu0 %1041
    %v1043 = vsel %vm353, %v1036, -inf
    %1044 = vmax.xlane.f32.xlu0 %v1043
    %v1045 = vpop.xlane.xlu0 %1044
    %v1046 = vsub.f32 %v1034, %v1039
    %v1047 = vsub.f32 %v1035, %v1042
    %v1048 = vsub.f32 %v1036, %v1045
    %v1049 = vmul.f32 %v1046, 1.442695
    %v1050 = vpow.pop %v1049
    %v1051 = vmul.f32 %v1047, 1.442695
    %v1052 = vpow.pop %v1051
    %v1053 = vmul.f32 %v1048, 1.442695
    %v1054 = vpow.pop %v1053
    %v1055 = vsel %vm353, %v1050, 0.0
    %1056 = vadd.xlane.f32.xlu0 %v1055
    %v1057 = vpop.xlane.xlu0 %1056
    %v1058 = vsel %vm353, %v1052, 0.0
    %1059 = vadd.xlane.f32.xlu0 %v1058
    %v1060 = vpop.xlane.xlu0 %1059
    %v1061 = vsel %vm353, %v1054, 0.0
    %1062 = vadd.xlane.f32.xlu0 %v1061
    %v1063 = vpop.xlane.xlu0 %1062
    %v1064 = vrcp.pop %v1057
    %v1065 = vrcp.pop %v1060
    %v1066 = vrcp.pop %v1063
    %v1067 = vmul.f32 %v1050, %v1064
    %v1068 = vmul.f32 %v1052, %v1065
    %v1069 = vmul.f32 %v1054, %v1066
    %1070 = vrot.lane.b32.xlu0 %v877, 120
    %v1071 = vpop.permute.xlu0 %1070
    %1072 = vrot.lane.b32.xlu0 %v880, 120
    %v1073 = vpop.permute.xlu0 %1072
    %1074 = vrot.lane.b32.xlu0 %v883, 120
    %v1075 = vpop.permute.xlu0 %1074
    %v1080 = vsel %vm353, %v1067, 0
    %v1083 = vsel %vm353, %v1068, 0
    %v1086 = vsel %vm353, %v1069, 0
    %1088 = vmatpush.msra.mxu0 0.0
    %1089 = vmatpush.msra.mxu0 0.0
    %1090 = vmatpush.msra.mxu0 0.0
    %1091 = vmatpush.msra.mxu0 0.0
    %1092 = vmatpush.msra.mxu0 0.0
    %1093 = vmatpush.msra.mxu0 0.0
    %1094 = vmatpush.msra.mxu0 0.0
    %1095 = vmatpush.msra.mxu0 0.0
    %1096 = vmatpush.msra.mxu0 0.0
    %1097 = vmatpush.msra.mxu0 0.0
    %1098 = vmatpush.msra.mxu0 0.0
    %1099 = vmatpush.msra.mxu0 0.0
    %1100 = vmatpush.msra.mxu0 0.0
    %1101 = vmatpush.msra.mxu0 %v1075
    %1102 = vmatpush.msra.mxu0 %v1073
    %1103 = vmatpush.msra.mxu0 %v1071
    %1104 = vmatmul.f32.gmra.mxu0 %v1080
    %v1105 = vpop.f32.mrf.mxu0
    %v1106 = vadd.f32 0.0, %v1105
    %1107 = vmatmul.f32.gmra.mxu0 %v1083
    %v1108 = vpop.f32.mrf.mxu0
    %v1109 = vadd.f32 0.0, %v1108
    %1110 = vmatmul.f32.gmra.mxu0 %v1086
    %v1111 = vpop.f32.mrf.mxu0
    %v1112 = vadd.f32 0.0, %v1111
    %1113 = vdwg.mxu0
    %1114 = vset.pattern.permute.xlu0 34
    %1115 = vperm.xlu0 %1114, %v877
    %v1116 = vpop.permute.xlu0 %1115
    %1118 = vset.pattern.permute.xlu0 34
    %1119 = vperm.xlu0 %1118, %v880
    %v1120 = vpop.permute.xlu0 %1119
    %1122 = vset.pattern.permute.xlu0 34
    %1123 = vperm.xlu0 %1122, %v883
    %v1124 = vpop.permute.xlu0 %1123
    %v1126 = vperm.slane %v908, 2
    %v1127 = vadd.f32 %v1116, %v1126
    %v1128 = vadd.f32 %v1120, %v1126
    %v1129 = vadd.f32 %v1124, %v1126
    %vm1130 = vcmp.gt.f32.partialorder %v1127, 0.0
    %vm1131 = vcmp.gt.f32.partialorder %v1128, 0.0
    %vm1132 = vcmp.gt.f32.partialorder %v1129, 0.0
    %v1133 = vmul.f32 %v1127, 0.2
    %v1134 = vmul.f32 %v1128, 0.2
    %v1135 = vmul.f32 %v1129, 0.2
    %v1136 = vsel %vm1130, %v1127, %v1133
    %v1137 = vsel %vm1131, %v1128, %v1134
    %v1138 = vsel %vm1132, %v1129, %v1135
    %v1139 = vsel %vm96, %v1136, -1e+30
    %v1140 = vsel %vm97, %v1137, -1e+30
    %v1141 = vsel %vm98, %v1138, -1e+30
    %v1142 = vsel %vm353, %v1139, -inf
    %1143 = vmax.xlane.f32.xlu0 %v1142
    %v1144 = vpop.xlane.xlu0 %1143
    %v1145 = vsel %vm353, %v1140, -inf
    %1146 = vmax.xlane.f32.xlu0 %v1145
    %v1147 = vpop.xlane.xlu0 %1146
    %v1148 = vsel %vm353, %v1141, -inf
    %1149 = vmax.xlane.f32.xlu0 %v1148
    %v1150 = vpop.xlane.xlu0 %1149
    %v1151 = vsub.f32 %v1139, %v1144
    %v1152 = vsub.f32 %v1140, %v1147
    %v1153 = vsub.f32 %v1141, %v1150
    %v1154 = vmul.f32 %v1151, 1.442695
    %v1155 = vpow.pop %v1154
    %v1156 = vmul.f32 %v1152, 1.442695
    %v1157 = vpow.pop %v1156
    %v1158 = vmul.f32 %v1153, 1.442695
    %v1159 = vpow.pop %v1158
    %v1160 = vsel %vm353, %v1155, 0.0
    %1161 = vadd.xlane.f32.xlu0 %v1160
    %v1162 = vpop.xlane.xlu0 %1161
    %v1163 = vsel %vm353, %v1157, 0.0
    %1164 = vadd.xlane.f32.xlu0 %v1163
    %v1165 = vpop.xlane.xlu0 %1164
    %v1166 = vsel %vm353, %v1159, 0.0
    %1167 = vadd.xlane.f32.xlu0 %v1166
    %v1168 = vpop.xlane.xlu0 %1167
    %v1169 = vrcp.pop %v1162
    %v1170 = vrcp.pop %v1165
    %v1171 = vrcp.pop %v1168
    %v1172 = vmul.f32 %v1155, %v1169
    %v1173 = vmul.f32 %v1157, %v1170
    %v1174 = vmul.f32 %v1159, %v1171
    %1175 = vrot.lane.b32.xlu0 %v877, 112
    %v1176 = vpop.permute.xlu0 %1175
    %1177 = vrot.lane.b32.xlu0 %v880, 112
    %v1178 = vpop.permute.xlu0 %1177
    %1179 = vrot.lane.b32.xlu0 %v883, 112
    %v1180 = vpop.permute.xlu0 %1179
    %v1185 = vsel %vm353, %v1172, 0
    %v1188 = vsel %vm353, %v1173, 0
    %v1191 = vsel %vm353, %v1174, 0
    %1193 = vmatpush.msra.mxu0 0.0
    %1194 = vmatpush.msra.mxu0 0.0
    %1195 = vmatpush.msra.mxu0 0.0
    %1196 = vmatpush.msra.mxu0 0.0
    %1197 = vmatpush.msra.mxu0 0.0
    %1198 = vmatpush.msra.mxu0 0.0
    %1199 = vmatpush.msra.mxu0 0.0
    %1200 = vmatpush.msra.mxu0 0.0
    %1201 = vmatpush.msra.mxu0 0.0
    %1202 = vmatpush.msra.mxu0 0.0
    %1203 = vmatpush.msra.mxu0 0.0
    %1204 = vmatpush.msra.mxu0 0.0
    %1205 = vmatpush.msra.mxu0 0.0
    %1206 = vmatpush.msra.mxu0 %v1180
    %1207 = vmatpush.msra.mxu0 %v1178
    %1208 = vmatpush.msra.mxu0 %v1176
    %1209 = vmatmul.f32.gmra.mxu0 %v1185
    %v1210 = vpop.f32.mrf.mxu0
    %v1211 = vadd.f32 0.0, %v1210
    %1212 = vmatmul.f32.gmra.mxu0 %v1188
    %v1213 = vpop.f32.mrf.mxu0
    %v1214 = vadd.f32 0.0, %v1213
    %1215 = vmatmul.f32.gmra.mxu0 %v1191
    %v1216 = vpop.f32.mrf.mxu0
    %v1217 = vadd.f32 0.0, %v1216
    %1218 = vdwg.mxu0
    %1219 = vset.pattern.permute.xlu0 35
    %1220 = vperm.xlu0 %1219, %v877
    %v1221 = vpop.permute.xlu0 %1220
    %1223 = vset.pattern.permute.xlu0 35
    %1224 = vperm.xlu0 %1223, %v880
    %v1225 = vpop.permute.xlu0 %1224
    %1227 = vset.pattern.permute.xlu0 35
    %1228 = vperm.xlu0 %1227, %v883
    %v1229 = vpop.permute.xlu0 %1228
    %v1231 = vperm.slane %v908, 3
    %v1232 = vadd.f32 %v1221, %v1231
    %v1233 = vadd.f32 %v1225, %v1231
    %v1234 = vadd.f32 %v1229, %v1231
    %vm1235 = vcmp.gt.f32.partialorder %v1232, 0.0
    %vm1236 = vcmp.gt.f32.partialorder %v1233, 0.0
    %vm1237 = vcmp.gt.f32.partialorder %v1234, 0.0
    %v1238 = vmul.f32 %v1232, 0.2
    %v1239 = vmul.f32 %v1233, 0.2
    %v1240 = vmul.f32 %v1234, 0.2
    %v1241 = vsel %vm1235, %v1232, %v1238
    %v1242 = vsel %vm1236, %v1233, %v1239
    %v1243 = vsel %vm1237, %v1234, %v1240
    %v1244 = vsel %vm96, %v1241, -1e+30
    %v1245 = vsel %vm97, %v1242, -1e+30
    %v1246 = vsel %vm98, %v1243, -1e+30
    %v1247 = vsel %vm353, %v1244, -inf
    %1248 = vmax.xlane.f32.xlu0 %v1247
    %v1249 = vpop.xlane.xlu0 %1248
    %v1250 = vsel %vm353, %v1245, -inf
    %1251 = vmax.xlane.f32.xlu0 %v1250
    %v1252 = vpop.xlane.xlu0 %1251
    %v1253 = vsel %vm353, %v1246, -inf
    %1254 = vmax.xlane.f32.xlu0 %v1253
    %v1255 = vpop.xlane.xlu0 %1254
    %v1256 = vsub.f32 %v1244, %v1249
    %v1257 = vsub.f32 %v1245, %v1252
    %v1258 = vsub.f32 %v1246, %v1255
    %v1259 = vmul.f32 %v1256, 1.442695
    %v1260 = vpow.pop %v1259
    %v1261 = vmul.f32 %v1257, 1.442695
    %v1262 = vpow.pop %v1261
    %v1263 = vmul.f32 %v1258, 1.442695
    %v1264 = vpow.pop %v1263
    %v1265 = vsel %vm353, %v1260, 0.0
    %1266 = vadd.xlane.f32.xlu0 %v1265
    %v1267 = vpop.xlane.xlu0 %1266
    %v1268 = vsel %vm353, %v1262, 0.0
    %1269 = vadd.xlane.f32.xlu0 %v1268
    %v1270 = vpop.xlane.xlu0 %1269
    %v1271 = vsel %vm353, %v1264, 0.0
    %1272 = vadd.xlane.f32.xlu0 %v1271
    %v1273 = vpop.xlane.xlu0 %1272
    %v1274 = vrcp.pop %v1267
    %v1275 = vrcp.pop %v1270
    %v1276 = vrcp.pop %v1273
    %v1277 = vmul.f32 %v1260, %v1274
    %v1278 = vmul.f32 %v1262, %v1275
    %v1279 = vmul.f32 %v1264, %v1276
    %1280 = vrot.lane.b32.xlu0 %v877, 104
    %v1281 = vpop.permute.xlu0 %1280
    %1282 = vrot.lane.b32.xlu0 %v880, 104
    %v1283 = vpop.permute.xlu0 %1282
    %1284 = vrot.lane.b32.xlu0 %v883, 104
    %v1285 = vpop.permute.xlu0 %1284
    %v1290 = vsel %vm353, %v1277, 0
    %v1293 = vsel %vm353, %v1278, 0
    %v1296 = vsel %vm353, %v1279, 0
    %1298 = vmatpush.msra.mxu0 0.0
    %1299 = vmatpush.msra.mxu0 0.0
    %1300 = vmatpush.msra.mxu0 0.0
    %1301 = vmatpush.msra.mxu0 0.0
    %1302 = vmatpush.msra.mxu0 0.0
    %1303 = vmatpush.msra.mxu0 0.0
    %1304 = vmatpush.msra.mxu0 0.0
    %1305 = vmatpush.msra.mxu0 0.0
    %1306 = vmatpush.msra.mxu0 0.0
    %1307 = vmatpush.msra.mxu0 0.0
    %1308 = vmatpush.msra.mxu0 0.0
    %1309 = vmatpush.msra.mxu0 0.0
    %1310 = vmatpush.msra.mxu0 0.0
    %1311 = vmatpush.msra.mxu0 %v1285
    %1312 = vmatpush.msra.mxu0 %v1283
    %1313 = vmatpush.msra.mxu0 %v1281
    %1314 = vmatmul.f32.gmra.mxu0 %v1290
    %v1315 = vpop.f32.mrf.mxu0
    %v1316 = vadd.f32 0.0, %v1315
    %1317 = vmatmul.f32.gmra.mxu0 %v1293
    %v1318 = vpop.f32.mrf.mxu0
    %v1319 = vadd.f32 0.0, %v1318
    %1320 = vmatmul.f32.gmra.mxu0 %v1296
    %v1321 = vpop.f32.mrf.mxu0
    %v1322 = vadd.f32 0.0, %v1321
    %1323 = vdwg.mxu0
    %v1324 = vld [vmem:[#allocation5 + $0x9] sm:$0x1]
    %1328 = vrot.lane.b32.xlu0 %v1106, 8
    %v1329 = vpop.permute.xlu0 %1328
    %1330 = vrot.lane.b32.xlu0 %v1109, 8
    %v1331 = vpop.permute.xlu0 %1330
    %1332 = vrot.lane.b32.xlu0 %v1112, 8
    %v1333 = vpop.permute.xlu0 %1332
    %1340 = vrot.lane.b32.xlu0 %v1211, 16
    %v1341 = vpop.permute.xlu0 %1340
    %1342 = vrot.lane.b32.xlu0 %v1214, 16
    %v1343 = vpop.permute.xlu0 %1342
    %1344 = vrot.lane.b32.xlu0 %v1217, 16
    %v1345 = vpop.permute.xlu0 %1344
    %1352 = vrot.lane.b32.xlu0 %v1316, 24
    %v1353 = vpop.permute.xlu0 %1352
    %1354 = vrot.lane.b32.xlu0 %v1319, 24
    %v1355 = vpop.permute.xlu0 %1354
    %1356 = vrot.lane.b32.xlu0 %v1322, 24
    %v1357 = vpop.permute.xlu0 %1356
    %v1361 = vsel %vm774, %v1001, %v1329
    %v1362 = vsel %vm774, %v1004, %v1331
    %v1363 = vsel %vm774, %v1007, %v1333
    %v1364 = vsel %vm104, %v1361, %v1341
    %v1365 = vsel %vm104, %v1362, %v1343
    %v1366 = vsel %vm104, %v1363, %v1345
    %v1367 = vsel %vm353, %v1364, %v1353
    %v1368 = vsel %vm353, %v1365, %v1355
    %v1369 = vsel %vm353, %v1366, %v1357
    %v1370 = vperm.slane %v1324, 0
    %v1371 = vadd.f32 %v1367, %v1370
    %v1372 = vadd.f32 %v1368, %v1370
    %v1373 = vadd.f32 %v1369, %v1370
    %v1374 = vmax.f32 %v1371, 0.0
    %v1375 = vmax.f32 %v1372, 0.0
    %v1376 = vmax.f32 %v1373, 0.0
    %v1377 = vld [vmem:[#allocation5 + $0x4] sm:$0x1]
    %v1378 = vld [vmem:[#allocation5 + $0x7] sm:$0x1]
    %v1379 = vsel %vm206, %v1374, 0.0
    %v1380 = vsel %vm206, %v1375, 0.0
    %v1381 = vadd.f32 %v1379, %v1380
    %v1382 = vsel %vm206, %v1376, 0.0
    %v1383 = vadd.f32 %v1381, %v1382
    %v1384 = vrot.slane %v1383, 4
    %v1385 = vadd.f32 %v1383, %v1384
    %v1386 = vrot.slane %v1385, 2
    %v1387 = vadd.f32 %v1385, %v1386
    %v1388 = vrot.slane %v1387, 1
    %v1389 = vadd.f32 %v1387, %v1388
    %v1390 = vmul.f32 %v1389, %v122
    %v1391 = vsub.f32 %v1374, %v1390
    %v1392 = vsub.f32 %v1375, %v1390
    %v1393 = vsub.f32 %v1376, %v1390
    %v1394 = vmul.f32 %v1391, %v1391
    %v1395 = vmul.f32 %v1392, %v1392
    %v1396 = vmul.f32 %v1393, %v1393
    %v1397 = vsel %vm206, %v1394, 0.0
    %v1398 = vsel %vm206, %v1395, 0.0
    %v1399 = vadd.f32 %v1397, %v1398
    %v1400 = vsel %vm206, %v1396, 0.0
    %v1401 = vadd.f32 %v1399, %v1400
    %v1402 = vrot.slane %v1401, 4
    %v1403 = vadd.f32 %v1401, %v1402
    %v1404 = vrot.slane %v1403, 2
    %v1405 = vadd.f32 %v1403, %v1404
    %v1406 = vrot.slane %v1405, 1
    %v1407 = vadd.f32 %v1405, %v1406
    %v1408 = vmul.f32 %v1407, %v122
    %v1409 = vadd.f32 %v1408, 1e-05
    %v1410 = vrsqrt.pop %v1409
    %v1411 = vmul.f32 %v1410, %v1409
    %v1412 = vmul.f32 %v1411, %v1410
    %v1413 = vmul.f32 0.5, %v1412
    %v1414 = vsub.f32 1.5, %v1413
    %v1415 = vmul.f32 %v1410, %v1414
    %vm1416 = vweird.f32 %v1409
    %vm1417 = vweird.f32 %v1410
    %vm1418 = vmor %vm1416, %vm1417
    %v1419 = vsel %vm1418, %v1410, %v1415
    %v1420 = vmul.f32 %v1391, %v1419
    %v1421 = vmul.f32 %v1392, %v1419
    %v1422 = vmul.f32 %v1393, %v1419
    %v1423 = vperm.slane %v1377, 0
    %v1424 = vmul.f32 %v1420, %v1423
    %v1425 = vmul.f32 %v1421, %v1423
    %v1426 = vmul.f32 %v1422, %v1423
    %v1427 = vperm.slane %v1378, 0
    %v1428 = vadd.f32 %v1424, %v1427
    %v1429 = vadd.f32 %v1425, %v1427
    %v1430 = vadd.f32 %v1426, %v1427
    %s1431 = scalar_lea.vmem [#allocation8], 64
    %v1432 = vld [vmem:[%s1431] sm:$0xff]
    %v1433 = vld [vmem:[%s1431 + $0x8] sm:$0xff]
    %v1434 = vld [vmem:[%s1431 + $0x10] sm:$0xff]
    %v1435 = vld [vmem:[%s1431 + $0x18] sm:$0xff]
    %v1437 = vsel %vm206, %v1428, 0
    %v1440 = vsel %vm206, %v1429, 0
    %v1443 = vsel %vm206, %v1430, 0
    %1445 = vmatpush.msra.mxu0 0.0
    %1446 = vmatpush.msra.mxu0 0.0
    %1447 = vmatpush.msra.mxu0 0.0
    %1448 = vmatpush.msra.mxu0 0.0
    %1449 = vmatpush.msra.mxu0 0.0
    %1450 = vmatpush.msra.mxu0 0.0
    %1451 = vmatpush.msra.mxu0 0.0
    %1452 = vmatpush.msra.mxu0 0.0
    %1453 = vmatpush.msra.mxu0 0.0
    %1454 = vmatpush.msra.mxu0 0.0
    %1455 = vmatpush.msra.mxu0 0.0
    %1456 = vmatpush.msra.mxu0 0.0
    %1457 = vmatpush.msra.mxu0 %v1435
    %1458 = vmatpush.msra.mxu0 %v1434
    %1459 = vmatpush.msra.mxu0 %v1433
    %1460 = vmatpush.msra.mxu0 %v1432
    %1461 = vmatmul.f32.gmra.mxu0 %v1437
    %v1462 = vpop.f32.mrf.mxu0
    %v1463 = vadd.f32 0.0, %v1462
    %1464 = vmatmul.f32.gmra.mxu0 %v1440
    %v1465 = vpop.f32.mrf.mxu0
    %v1466 = vadd.f32 0.0, %v1465
    %1467 = vmatmul.f32.gmra.mxu0 %v1443
    %v1468 = vpop.f32.mrf.mxu0
    %v1469 = vadd.f32 0.0, %v1468
    %1470 = vdwg.mxu0
    %s1471 = scalar_lea.vmem %s6, 8
    %v1472 = vld [vmem:[%s1471] sm:$0xf]
    %v1474 = vsel %vm206, %v1472, 0
    %1476 = vmatpush.xpose.msra.mxu0 0.0
    %1477 = vmatpush.xpose.msra.mxu0 0.0
    %1478 = vmatpush.xpose.msra.mxu0 0.0
    %1479 = vmatpush.xpose.msra.mxu0 0.0
    %1480 = vmatpush.xpose.msra.mxu0 0.0
    %1481 = vmatpush.xpose.msra.mxu0 0.0
    %1482 = vmatpush.xpose.msra.mxu0 0.0
    %1483 = vmatpush.xpose.msra.mxu0 0.0
    %1484 = vmatpush.xpose.msra.mxu0 0.0
    %1485 = vmatpush.xpose.msra.mxu0 0.0
    %1486 = vmatpush.xpose.msra.mxu0 0.0
    %1487 = vmatpush.xpose.msra.mxu0 0.0
    %1488 = vmatpush.xpose.msra.mxu0 0.0
    %1489 = vmatpush.xpose.msra.mxu0 %v1443
    %1490 = vmatpush.xpose.msra.mxu0 %v1440
    %1491 = vmatpush.xpose.msra.mxu0 %v1437
    %1492 = vmatmul.f32.gmra.mxu0 %v1474
    %v1493 = vpop.f32.mrf.mxu0
    %v1494 = vadd.f32 0.0, %v1493
    %1495 = vdwg.mxu0
    %1497 = vset.pattern.permute.xlu0 32
    %1498 = vperm.xlu0 %1497, %v1463
    %v1499 = vpop.permute.xlu0 %1498
    %1502 = vset.pattern.permute.xlu0 32
    %1503 = vperm.xlu0 %1502, %v1466
    %v1504 = vpop.permute.xlu0 %1503
    %1507 = vset.pattern.permute.xlu0 32
    %1508 = vperm.xlu0 %1507, %v1469
    %v1509 = vpop.permute.xlu0 %1508
    %v1511 = vperm.slane %v1494, 0
    %v1512 = vadd.f32 %v1499, %v1511
    %v1513 = vadd.f32 %v1504, %v1511
    %v1514 = vadd.f32 %v1509, %v1511
    %vm1515 = vcmp.gt.f32.partialorder %v1512, 0.0
    %vm1516 = vcmp.gt.f32.partialorder %v1513, 0.0
    %vm1517 = vcmp.gt.f32.partialorder %v1514, 0.0
    %v1518 = vmul.f32 %v1512, 0.2
    %v1519 = vmul.f32 %v1513, 0.2
    %v1520 = vmul.f32 %v1514, 0.2
    %v1521 = vsel %vm1515, %v1512, %v1518
    %v1522 = vsel %vm1516, %v1513, %v1519
    %v1523 = vsel %vm1517, %v1514, %v1520
    %v1524 = vsel %vm96, %v1521, -1e+30
    %v1525 = vsel %vm97, %v1522, -1e+30
    %v1526 = vsel %vm98, %v1523, -1e+30
    %v1527 = vsel %vm353, %v1524, -inf
    %1528 = vmax.xlane.f32.xlu0 %v1527
    %v1529 = vpop.xlane.xlu0 %1528
    %v1530 = vsel %vm353, %v1525, -inf
    %1531 = vmax.xlane.f32.xlu0 %v1530
    %v1532 = vpop.xlane.xlu0 %1531
    %v1533 = vsel %vm353, %v1526, -inf
    %1534 = vmax.xlane.f32.xlu0 %v1533
    %v1535 = vpop.xlane.xlu0 %1534
    %v1536 = vsub.f32 %v1524, %v1529
    %v1537 = vsub.f32 %v1525, %v1532
    %v1538 = vsub.f32 %v1526, %v1535
    %v1539 = vmul.f32 %v1536, 1.442695
    %v1540 = vpow.pop %v1539
    %v1541 = vmul.f32 %v1537, 1.442695
    %v1542 = vpow.pop %v1541
    %v1543 = vmul.f32 %v1538, 1.442695
    %v1544 = vpow.pop %v1543
    %v1545 = vsel %vm353, %v1540, 0.0
    %1546 = vadd.xlane.f32.xlu0 %v1545
    %v1547 = vpop.xlane.xlu0 %1546
    %v1548 = vsel %vm353, %v1542, 0.0
    %1549 = vadd.xlane.f32.xlu0 %v1548
    %v1550 = vpop.xlane.xlu0 %1549
    %v1551 = vsel %vm353, %v1544, 0.0
    %1552 = vadd.xlane.f32.xlu0 %v1551
    %v1553 = vpop.xlane.xlu0 %1552
    %v1554 = vrcp.pop %v1547
    %v1555 = vrcp.pop %v1550
    %v1556 = vrcp.pop %v1553
    %v1557 = vmul.f32 %v1540, %v1554
    %v1558 = vmul.f32 %v1542, %v1555
    %v1559 = vmul.f32 %v1544, %v1556
    %v1561 = vsel %vm353, %v1557, 0
    %v1564 = vsel %vm353, %v1558, 0
    %v1567 = vsel %vm353, %v1559, 0
    %1569 = vmatpush.msra.mxu0 0.0
    %1570 = vmatpush.msra.mxu0 0.0
    %1571 = vmatpush.msra.mxu0 0.0
    %1572 = vmatpush.msra.mxu0 0.0
    %1573 = vmatpush.msra.mxu0 0.0
    %1574 = vmatpush.msra.mxu0 0.0
    %1575 = vmatpush.msra.mxu0 0.0
    %1576 = vmatpush.msra.mxu0 0.0
    %1577 = vmatpush.msra.mxu0 0.0
    %1578 = vmatpush.msra.mxu0 0.0
    %1579 = vmatpush.msra.mxu0 0.0
    %1580 = vmatpush.msra.mxu0 0.0
    %1581 = vmatpush.msra.mxu0 0.0
    %1582 = vmatpush.msra.mxu0 %v1469
    %1583 = vmatpush.msra.mxu0 %v1466
    %1584 = vmatpush.msra.mxu0 %v1463
    %1585 = vmatmul.f32.gmra.mxu0 %v1561
    %v1586 = vpop.f32.mrf.mxu0
    %v1587 = vadd.f32 0.0, %v1586
    %1588 = vmatmul.f32.gmra.mxu0 %v1564
    %v1589 = vpop.f32.mrf.mxu0
    %v1590 = vadd.f32 0.0, %v1589
    %1591 = vmatmul.f32.gmra.mxu0 %v1567
    %v1592 = vpop.f32.mrf.mxu0
    %v1593 = vadd.f32 0.0, %v1592
    %1594 = vdwg.mxu0
    %1595 = vset.pattern.permute.xlu0 33
    %1596 = vperm.xlu0 %1595, %v1463
    %v1597 = vpop.permute.xlu0 %1596
    %1599 = vset.pattern.permute.xlu0 33
    %1600 = vperm.xlu0 %1599, %v1466
    %v1601 = vpop.permute.xlu0 %1600
    %1603 = vset.pattern.permute.xlu0 33
    %1604 = vperm.xlu0 %1603, %v1469
    %v1605 = vpop.permute.xlu0 %1604
    %v1607 = vperm.slane %v1494, 1
    %v1608 = vadd.f32 %v1597, %v1607
    %v1609 = vadd.f32 %v1601, %v1607
    %v1610 = vadd.f32 %v1605, %v1607
    %vm1611 = vcmp.gt.f32.partialorder %v1608, 0.0
    %vm1612 = vcmp.gt.f32.partialorder %v1609, 0.0
    %vm1613 = vcmp.gt.f32.partialorder %v1610, 0.0
    %v1614 = vmul.f32 %v1608, 0.2
    %v1615 = vmul.f32 %v1609, 0.2
    %v1616 = vmul.f32 %v1610, 0.2
    %v1617 = vsel %vm1611, %v1608, %v1614
    %v1618 = vsel %vm1612, %v1609, %v1615
    %v1619 = vsel %vm1613, %v1610, %v1616
    %v1620 = vsel %vm96, %v1617, -1e+30
    %v1621 = vsel %vm97, %v1618, -1e+30
    %v1622 = vsel %vm98, %v1619, -1e+30
    %v1623 = vsel %vm353, %v1620, -inf
    %1624 = vmax.xlane.f32.xlu0 %v1623
    %v1625 = vpop.xlane.xlu0 %1624
    %v1626 = vsel %vm353, %v1621, -inf
    %1627 = vmax.xlane.f32.xlu0 %v1626
    %v1628 = vpop.xlane.xlu0 %1627
    %v1629 = vsel %vm353, %v1622, -inf
    %1630 = vmax.xlane.f32.xlu0 %v1629
    %v1631 = vpop.xlane.xlu0 %1630
    %v1632 = vsub.f32 %v1620, %v1625
    %v1633 = vsub.f32 %v1621, %v1628
    %v1634 = vsub.f32 %v1622, %v1631
    %v1635 = vmul.f32 %v1632, 1.442695
    %v1636 = vpow.pop %v1635
    %v1637 = vmul.f32 %v1633, 1.442695
    %v1638 = vpow.pop %v1637
    %v1639 = vmul.f32 %v1634, 1.442695
    %v1640 = vpow.pop %v1639
    %v1641 = vsel %vm353, %v1636, 0.0
    %1642 = vadd.xlane.f32.xlu0 %v1641
    %v1643 = vpop.xlane.xlu0 %1642
    %v1644 = vsel %vm353, %v1638, 0.0
    %1645 = vadd.xlane.f32.xlu0 %v1644
    %v1646 = vpop.xlane.xlu0 %1645
    %v1647 = vsel %vm353, %v1640, 0.0
    %1648 = vadd.xlane.f32.xlu0 %v1647
    %v1649 = vpop.xlane.xlu0 %1648
    %v1650 = vrcp.pop %v1643
    %v1651 = vrcp.pop %v1646
    %v1652 = vrcp.pop %v1649
    %v1653 = vmul.f32 %v1636, %v1650
    %v1654 = vmul.f32 %v1638, %v1651
    %v1655 = vmul.f32 %v1640, %v1652
    %1656 = vrot.lane.b32.xlu0 %v1463, 120
    %v1657 = vpop.permute.xlu0 %1656
    %1658 = vrot.lane.b32.xlu0 %v1466, 120
    %v1659 = vpop.permute.xlu0 %1658
    %1660 = vrot.lane.b32.xlu0 %v1469, 120
    %v1661 = vpop.permute.xlu0 %1660
    %v1666 = vsel %vm353, %v1653, 0
    %v1669 = vsel %vm353, %v1654, 0
    %v1672 = vsel %vm353, %v1655, 0
    %1674 = vmatpush.msra.mxu0 0.0
    %1675 = vmatpush.msra.mxu0 0.0
    %1676 = vmatpush.msra.mxu0 0.0
    %1677 = vmatpush.msra.mxu0 0.0
    %1678 = vmatpush.msra.mxu0 0.0
    %1679 = vmatpush.msra.mxu0 0.0
    %1680 = vmatpush.msra.mxu0 0.0
    %1681 = vmatpush.msra.mxu0 0.0
    %1682 = vmatpush.msra.mxu0 0.0
    %1683 = vmatpush.msra.mxu0 0.0
    %1684 = vmatpush.msra.mxu0 0.0
    %1685 = vmatpush.msra.mxu0 0.0
    %1686 = vmatpush.msra.mxu0 0.0
    %1687 = vmatpush.msra.mxu0 %v1661
    %1688 = vmatpush.msra.mxu0 %v1659
    %1689 = vmatpush.msra.mxu0 %v1657
    %1690 = vmatmul.f32.gmra.mxu0 %v1666
    %v1691 = vpop.f32.mrf.mxu0
    %v1692 = vadd.f32 0.0, %v1691
    %1693 = vmatmul.f32.gmra.mxu0 %v1669
    %v1694 = vpop.f32.mrf.mxu0
    %v1695 = vadd.f32 0.0, %v1694
    %1696 = vmatmul.f32.gmra.mxu0 %v1672
    %v1697 = vpop.f32.mrf.mxu0
    %v1698 = vadd.f32 0.0, %v1697
    %1699 = vdwg.mxu0
    %1700 = vset.pattern.permute.xlu0 34
    %1701 = vperm.xlu0 %1700, %v1463
    %v1702 = vpop.permute.xlu0 %1701
    %1704 = vset.pattern.permute.xlu0 34
    %1705 = vperm.xlu0 %1704, %v1466
    %v1706 = vpop.permute.xlu0 %1705
    %1708 = vset.pattern.permute.xlu0 34
    %1709 = vperm.xlu0 %1708, %v1469
    %v1710 = vpop.permute.xlu0 %1709
    %v1712 = vperm.slane %v1494, 2
    %v1713 = vadd.f32 %v1702, %v1712
    %v1714 = vadd.f32 %v1706, %v1712
    %v1715 = vadd.f32 %v1710, %v1712
    %vm1716 = vcmp.gt.f32.partialorder %v1713, 0.0
    %vm1717 = vcmp.gt.f32.partialorder %v1714, 0.0
    %vm1718 = vcmp.gt.f32.partialorder %v1715, 0.0
    %v1719 = vmul.f32 %v1713, 0.2
    %v1720 = vmul.f32 %v1714, 0.2
    %v1721 = vmul.f32 %v1715, 0.2
    %v1722 = vsel %vm1716, %v1713, %v1719
    %v1723 = vsel %vm1717, %v1714, %v1720
    %v1724 = vsel %vm1718, %v1715, %v1721
    %v1725 = vsel %vm96, %v1722, -1e+30
    %v1726 = vsel %vm97, %v1723, -1e+30
    %v1727 = vsel %vm98, %v1724, -1e+30
    %v1728 = vsel %vm353, %v1725, -inf
    %1729 = vmax.xlane.f32.xlu0 %v1728
    %v1730 = vpop.xlane.xlu0 %1729
    %v1731 = vsel %vm353, %v1726, -inf
    %1732 = vmax.xlane.f32.xlu0 %v1731
    %v1733 = vpop.xlane.xlu0 %1732
    %v1734 = vsel %vm353, %v1727, -inf
    %1735 = vmax.xlane.f32.xlu0 %v1734
    %v1736 = vpop.xlane.xlu0 %1735
    %v1737 = vsub.f32 %v1725, %v1730
    %v1738 = vsub.f32 %v1726, %v1733
    %v1739 = vsub.f32 %v1727, %v1736
    %v1740 = vmul.f32 %v1737, 1.442695
    %v1741 = vpow.pop %v1740
    %v1742 = vmul.f32 %v1738, 1.442695
    %v1743 = vpow.pop %v1742
    %v1744 = vmul.f32 %v1739, 1.442695
    %v1745 = vpow.pop %v1744
    %v1746 = vsel %vm353, %v1741, 0.0
    %1747 = vadd.xlane.f32.xlu0 %v1746
    %v1748 = vpop.xlane.xlu0 %1747
    %v1749 = vsel %vm353, %v1743, 0.0
    %1750 = vadd.xlane.f32.xlu0 %v1749
    %v1751 = vpop.xlane.xlu0 %1750
    %v1752 = vsel %vm353, %v1745, 0.0
    %1753 = vadd.xlane.f32.xlu0 %v1752
    %v1754 = vpop.xlane.xlu0 %1753
    %v1755 = vrcp.pop %v1748
    %v1756 = vrcp.pop %v1751
    %v1757 = vrcp.pop %v1754
    %v1758 = vmul.f32 %v1741, %v1755
    %v1759 = vmul.f32 %v1743, %v1756
    %v1760 = vmul.f32 %v1745, %v1757
    %1761 = vrot.lane.b32.xlu0 %v1463, 112
    %v1762 = vpop.permute.xlu0 %1761
    %1763 = vrot.lane.b32.xlu0 %v1466, 112
    %v1764 = vpop.permute.xlu0 %1763
    %1765 = vrot.lane.b32.xlu0 %v1469, 112
    %v1766 = vpop.permute.xlu0 %1765
    %v1771 = vsel %vm353, %v1758, 0
    %v1774 = vsel %vm353, %v1759, 0
    %v1777 = vsel %vm353, %v1760, 0
    %1779 = vmatpush.msra.mxu0 0.0
    %1780 = vmatpush.msra.mxu0 0.0
    %1781 = vmatpush.msra.mxu0 0.0
    %1782 = vmatpush.msra.mxu0 0.0
    %1783 = vmatpush.msra.mxu0 0.0
    %1784 = vmatpush.msra.mxu0 0.0
    %1785 = vmatpush.msra.mxu0 0.0
    %1786 = vmatpush.msra.mxu0 0.0
    %1787 = vmatpush.msra.mxu0 0.0
    %1788 = vmatpush.msra.mxu0 0.0
    %1789 = vmatpush.msra.mxu0 0.0
    %1790 = vmatpush.msra.mxu0 0.0
    %1791 = vmatpush.msra.mxu0 0.0
    %1792 = vmatpush.msra.mxu0 %v1766
    %1793 = vmatpush.msra.mxu0 %v1764
    %1794 = vmatpush.msra.mxu0 %v1762
    %1795 = vmatmul.f32.gmra.mxu0 %v1771
    %v1796 = vpop.f32.mrf.mxu0
    %v1797 = vadd.f32 0.0, %v1796
    %1798 = vmatmul.f32.gmra.mxu0 %v1774
    %v1799 = vpop.f32.mrf.mxu0
    %v1800 = vadd.f32 0.0, %v1799
    %1801 = vmatmul.f32.gmra.mxu0 %v1777
    %v1802 = vpop.f32.mrf.mxu0
    %v1803 = vadd.f32 0.0, %v1802
    %1804 = vdwg.mxu0
    %1805 = vset.pattern.permute.xlu0 35
    %1806 = vperm.xlu0 %1805, %v1463
    %v1807 = vpop.permute.xlu0 %1806
    %1809 = vset.pattern.permute.xlu0 35
    %1810 = vperm.xlu0 %1809, %v1466
    %v1811 = vpop.permute.xlu0 %1810
    %1813 = vset.pattern.permute.xlu0 35
    %1814 = vperm.xlu0 %1813, %v1469
    %v1815 = vpop.permute.xlu0 %1814
    %v1817 = vperm.slane %v1494, 3
    %v1818 = vadd.f32 %v1807, %v1817
    %v1819 = vadd.f32 %v1811, %v1817
    %v1820 = vadd.f32 %v1815, %v1817
    %vm1821 = vcmp.gt.f32.partialorder %v1818, 0.0
    %vm1822 = vcmp.gt.f32.partialorder %v1819, 0.0
    %vm1823 = vcmp.gt.f32.partialorder %v1820, 0.0
    %v1824 = vmul.f32 %v1818, 0.2
    %v1825 = vmul.f32 %v1819, 0.2
    %v1826 = vmul.f32 %v1820, 0.2
    %v1827 = vsel %vm1821, %v1818, %v1824
    %v1828 = vsel %vm1822, %v1819, %v1825
    %v1829 = vsel %vm1823, %v1820, %v1826
    %v1830 = vsel %vm96, %v1827, -1e+30
    %v1831 = vsel %vm97, %v1828, -1e+30
    %v1832 = vsel %vm98, %v1829, -1e+30
    %v1833 = vsel %vm353, %v1830, -inf
    %1834 = vmax.xlane.f32.xlu0 %v1833
    %v1835 = vpop.xlane.xlu0 %1834
    %v1836 = vsel %vm353, %v1831, -inf
    %1837 = vmax.xlane.f32.xlu0 %v1836
    %v1838 = vpop.xlane.xlu0 %1837
    %v1839 = vsel %vm353, %v1832, -inf
    %1840 = vmax.xlane.f32.xlu0 %v1839
    %v1841 = vpop.xlane.xlu0 %1840
    %v1842 = vsub.f32 %v1830, %v1835
    %v1843 = vsub.f32 %v1831, %v1838
    %v1844 = vsub.f32 %v1832, %v1841
    %v1845 = vmul.f32 %v1842, 1.442695
    %v1846 = vpow.pop %v1845
    %v1847 = vmul.f32 %v1843, 1.442695
    %v1848 = vpow.pop %v1847
    %v1849 = vmul.f32 %v1844, 1.442695
    %v1850 = vpow.pop %v1849
    %v1851 = vsel %vm353, %v1846, 0.0
    %1852 = vadd.xlane.f32.xlu0 %v1851
    %v1853 = vpop.xlane.xlu0 %1852
    %v1854 = vsel %vm353, %v1848, 0.0
    %1855 = vadd.xlane.f32.xlu0 %v1854
    %v1856 = vpop.xlane.xlu0 %1855
    %v1857 = vsel %vm353, %v1850, 0.0
    %1858 = vadd.xlane.f32.xlu0 %v1857
    %v1859 = vpop.xlane.xlu0 %1858
    %v1860 = vrcp.pop %v1853
    %v1861 = vrcp.pop %v1856
    %v1862 = vrcp.pop %v1859
    %v1863 = vmul.f32 %v1846, %v1860
    %v1864 = vmul.f32 %v1848, %v1861
    %v1865 = vmul.f32 %v1850, %v1862
    %1866 = vrot.lane.b32.xlu0 %v1463, 104
    %v1867 = vpop.permute.xlu0 %1866
    %1868 = vrot.lane.b32.xlu0 %v1466, 104
    %v1869 = vpop.permute.xlu0 %1868
    %1870 = vrot.lane.b32.xlu0 %v1469, 104
    %v1871 = vpop.permute.xlu0 %1870
    %v1876 = vsel %vm353, %v1863, 0
    %v1879 = vsel %vm353, %v1864, 0
    %v1882 = vsel %vm353, %v1865, 0
    %1884 = vmatpush.msra.mxu0 0.0
    %1885 = vmatpush.msra.mxu0 0.0
    %1886 = vmatpush.msra.mxu0 0.0
    %1887 = vmatpush.msra.mxu0 0.0
    %1888 = vmatpush.msra.mxu0 0.0
    %1889 = vmatpush.msra.mxu0 0.0
    %1890 = vmatpush.msra.mxu0 0.0
    %1891 = vmatpush.msra.mxu0 0.0
    %1892 = vmatpush.msra.mxu0 0.0
    %1893 = vmatpush.msra.mxu0 0.0
    %1894 = vmatpush.msra.mxu0 0.0
    %1895 = vmatpush.msra.mxu0 0.0
    %1896 = vmatpush.msra.mxu0 0.0
    %1897 = vmatpush.msra.mxu0 %v1871
    %1898 = vmatpush.msra.mxu0 %v1869
    %1899 = vmatpush.msra.mxu0 %v1867
    %1900 = vmatmul.f32.gmra.mxu0 %v1876
    %v1901 = vpop.f32.mrf.mxu0
    %v1902 = vadd.f32 0.0, %v1901
    %1903 = vmatmul.f32.gmra.mxu0 %v1879
    %v1904 = vpop.f32.mrf.mxu0
    %v1905 = vadd.f32 0.0, %v1904
    %1906 = vmatmul.f32.gmra.mxu0 %v1882
    %v1907 = vpop.f32.mrf.mxu0
    %v1908 = vadd.f32 0.0, %v1907
    %1909 = vdwg.mxu0
    %v1910 = vld [vmem:[#allocation5 + $0xa] sm:$0x1]
    %1914 = vrot.lane.b32.xlu0 %v1692, 8
    %v1915 = vpop.permute.xlu0 %1914
    %1916 = vrot.lane.b32.xlu0 %v1695, 8
    %v1917 = vpop.permute.xlu0 %1916
    %1918 = vrot.lane.b32.xlu0 %v1698, 8
    %v1919 = vpop.permute.xlu0 %1918
    %1926 = vrot.lane.b32.xlu0 %v1797, 16
    %v1927 = vpop.permute.xlu0 %1926
    %1928 = vrot.lane.b32.xlu0 %v1800, 16
    %v1929 = vpop.permute.xlu0 %1928
    %1930 = vrot.lane.b32.xlu0 %v1803, 16
    %v1931 = vpop.permute.xlu0 %1930
    %1938 = vrot.lane.b32.xlu0 %v1902, 24
    %v1939 = vpop.permute.xlu0 %1938
    %1940 = vrot.lane.b32.xlu0 %v1905, 24
    %v1941 = vpop.permute.xlu0 %1940
    %1942 = vrot.lane.b32.xlu0 %v1908, 24
    %v1943 = vpop.permute.xlu0 %1942
    %v1947 = vsel %vm774, %v1587, %v1915
    %v1948 = vsel %vm774, %v1590, %v1917
    %v1949 = vsel %vm774, %v1593, %v1919
    %v1950 = vsel %vm104, %v1947, %v1927
    %v1951 = vsel %vm104, %v1948, %v1929
    %v1952 = vsel %vm104, %v1949, %v1931
    %v1953 = vsel %vm353, %v1950, %v1939
    %v1954 = vsel %vm353, %v1951, %v1941
    %v1955 = vsel %vm353, %v1952, %v1943
    %v1956 = vperm.slane %v1910, 0
    %v1957 = vadd.f32 %v1953, %v1956
    %v1958 = vadd.f32 %v1954, %v1956
    %v1959 = vadd.f32 %v1955, %v1956
    %v1960 = vmax.f32 %v1957, 0.0
    %v1961 = vmax.f32 %v1958, 0.0
    %v1962 = vmax.f32 %v1959, 0.0
    %v1963 = vld [vmem:[%s2] sm:$0x3]
    %v1965 = vsel %vm353, %v1963, 0
    %1967 = vmatpush.msra.mxu0 0.0
    %1968 = vmatpush.msra.mxu0 0.0
    %1969 = vmatpush.msra.mxu0 0.0
    %1970 = vmatpush.msra.mxu0 0.0
    %1971 = vmatpush.msra.mxu0 0.0
    %1972 = vmatpush.msra.mxu0 0.0
    %1973 = vmatpush.msra.mxu0 0.0
    %1974 = vmatpush.msra.mxu0 0.0
    %1975 = vmatpush.msra.mxu0 0.0
    %1976 = vmatpush.msra.mxu0 0.0
    %1977 = vmatpush.msra.mxu0 0.0
    %1978 = vmatpush.msra.mxu0 0.0
    %1979 = vmatpush.msra.mxu0 0.0
    %1980 = vmatpush.msra.mxu0 %v1962
    %1981 = vmatpush.msra.mxu0 %v1961
    %1982 = vmatpush.msra.mxu0 %v1960
    %1983 = vmatmul.f32.gmra.mxu0 %v1965
    %v1984 = vpop.f32.mrf.mxu0
    %v1985 = vadd.f32 0.0, %v1984
    %1986 = vdwg.mxu0
    %v1987 = vld [vmem:[%s7] sm:$0xff]
    %v1988 = vld [vmem:[%s7 + $0x8] sm:$0xff]
    %v1989 = vld [vmem:[%s7 + $0x10] sm:$0xff]
    %v1990 = vld [vmem:[%s7 + $0x18] sm:$0xff]
    %v1991 = vld [vmem:[#allocation5 + $0xb] sm:$0x1]
    %v1992 = vld [vmem:[#allocation5 + $0xc] sm:$0x1]
    %vm1993 = vcmask 254976
    %v1994 = vsel %vm1993, %v1985, 0.0
    %v1995 = vrot.slane %v1994, 4
    %v1996 = vadd.f32 %v1994, %v1995
    %v1997 = vrot.slane %v1996, 2
    %v1998 = vadd.f32 %v1996, %v1997
    %v1999 = vrot.slane %v1998, 1
    %v2000 = vadd.f32 %v1998, %v1999
    %v2001 = vrcp.pop 2.0
    %v2002 = vmul.f32 2.0, %v2001
    %v2003 = vsub.f32 1.0, %v2002
    %v2004 = vmul.f32 %v2001, %v2003
    %v2005 = vadd.f32 %v2001, %v2004
    %vm2006 = vweird.f32 %v2001
    %v2007 = vsel %vm2006, %v2001, %v2005
    %v2008 = vmul.f32 %v2000, %v2007
    %v2009 = vsub.f32 %v1985, %v2008
    %v2010 = vmul.f32 %v2009, %v2009
    %v2011 = vsel %vm1993, %v2010, 0.0
    %v2012 = vrot.slane %v2011, 4
    %v2013 = vadd.f32 %v2011, %v2012
    %v2014 = vrot.slane %v2013, 2
    %v2015 = vadd.f32 %v2013, %v2014
    %v2016 = vrot.slane %v2015, 1
    %v2017 = vadd.f32 %v2015, %v2016
    %v2018 = vmul.f32 %v2017, %v2007
    %v2019 = vadd.f32 %v2018, 1e-05
    %v2020 = vrsqrt.pop %v2019
    %v2021 = vmul.f32 %v2020, %v2019
    %v2022 = vmul.f32 %v2021, %v2020
    %v2023 = vmul.f32 0.5, %v2022
    %v2024 = vsub.f32 1.5, %v2023
    %v2025 = vmul.f32 %v2020, %v2024
    %vm2026 = vweird.f32 %v2019
    %vm2027 = vweird.f32 %v2020
    %vm2028 = vmor %vm2026, %vm2027
    %v2029 = vsel %vm2028, %v2020, %v2025
    %v2030 = vmul.f32 %v2009, %v2029
    %v2031 = vperm.slane %v1991, 0
    %v2032 = vmul.f32 %v2030, %v2031
    %v2033 = vperm.slane %v1992, 0
    %v2034 = vadd.f32 %v2032, %v2033
    %v2035 = vld [vmem:[#allocation5 + $0xd] sm:$0x1]
    %v2036 = vperm.slane %v2035, 0
    %v2038 = vsel %vm206, %v2034, 0
    %2040 = vmatpush.msra.mxu0 0.0
    %2041 = vmatpush.msra.mxu0 0.0
    %2042 = vmatpush.msra.mxu0 0.0
    %2043 = vmatpush.msra.mxu0 0.0
    %2044 = vmatpush.msra.mxu0 0.0
    %2045 = vmatpush.msra.mxu0 0.0
    %2046 = vmatpush.msra.mxu0 0.0
    %2047 = vmatpush.msra.mxu0 0.0
    %2048 = vmatpush.msra.mxu0 0.0
    %2049 = vmatpush.msra.mxu0 0.0
    %2050 = vmatpush.msra.mxu0 0.0
    %2051 = vmatpush.msra.mxu0 0.0
    %2052 = vmatpush.msra.mxu0 %v1990
    %2053 = vmatpush.msra.mxu0 %v1989
    %2054 = vmatpush.msra.mxu0 %v1988
    %2055 = vmatpush.msra.mxu0 %v1987
    %2056 = vmatmul.f32.gmra.mxu0 %v2038
    %v2057 = vpop.f32.mrf.mxu0
    %v2058 = vadd.f32 %v2036, %v2057
    %2059 = vdwg.mxu0
    %v2060 = vmax.f32 %v2058, 0.0
    %v2061 = vld [vmem:[#allocation5 + $0xe] sm:$0x1]
    %v2062 = vld [vmem:[#allocation5 + $0xf] sm:$0x1]
    %v2063 = vsel %vm1993, %v2060, 0.0
    %v2064 = vrot.slane %v2063, 4
    %v2065 = vadd.f32 %v2063, %v2064
    %v2066 = vrot.slane %v2065, 2
    %v2067 = vadd.f32 %v2065, %v2066
    %v2068 = vrot.slane %v2067, 1
    %v2069 = vadd.f32 %v2067, %v2068
    %v2070 = vmul.f32 %v2069, %v2007
    %v2071 = vsub.f32 %v2060, %v2070
    %v2072 = vmul.f32 %v2071, %v2071
    %v2073 = vsel %vm1993, %v2072, 0.0
    %v2074 = vrot.slane %v2073, 4
    %v2075 = vadd.f32 %v2073, %v2074
    %v2076 = vrot.slane %v2075, 2
    %v2077 = vadd.f32 %v2075, %v2076
    %v2078 = vrot.slane %v2077, 1
    %v2079 = vadd.f32 %v2077, %v2078
    %v2080 = vmul.f32 %v2079, %v2007
    %v2081 = vadd.f32 %v2080, 1e-05
    %v2082 = vrsqrt.pop %v2081
    %v2083 = vmul.f32 %v2082, %v2081
    %v2084 = vmul.f32 %v2083, %v2082
    %v2085 = vmul.f32 0.5, %v2084
    %v2086 = vsub.f32 1.5, %v2085
    %v2087 = vmul.f32 %v2082, %v2086
    %vm2088 = vweird.f32 %v2081
    %vm2089 = vweird.f32 %v2082
    %vm2090 = vmor %vm2088, %vm2089
    %v2091 = vsel %vm2090, %v2082, %v2087
    %v2092 = vmul.f32 %v2071, %v2091
    %v2093 = vperm.slane %v2061, 0
    %v2094 = vmul.f32 %v2092, %v2093
    %v2095 = vperm.slane %v2062, 0
    %v2096 = vadd.f32 %v2094, %v2095
    %v2097 = vld [vmem:[#allocation5 + $0x10] sm:$0x1]
    %v2098 = vperm.slane %v2097, 0
    %2103 = vrot.lane.b32.xlu0 %v1987, 96
    %v2104 = vpop.permute.xlu0 %2103
    %2105 = vrot.lane.b32.xlu0 %v1988, 96
    %v2106 = vpop.permute.xlu0 %2105
    %2107 = vrot.lane.b32.xlu0 %v1989, 96
    %v2108 = vpop.permute.xlu0 %2107
    %2109 = vrot.lane.b32.xlu0 %v1990, 96
    %v2110 = vpop.permute.xlu0 %2109
    %v2116 = vsel %vm206, %v2096, 0
    %2118 = vmatpush.msra.mxu0 0.0
    %2119 = vmatpush.msra.mxu0 0.0
    %2120 = vmatpush.msra.mxu0 0.0
    %2121 = vmatpush.msra.mxu0 0.0
    %2122 = vmatpush.msra.mxu0 0.0
    %2123 = vmatpush.msra.mxu0 0.0
    %2124 = vmatpush.msra.mxu0 0.0
    %2125 = vmatpush.msra.mxu0 0.0
    %2126 = vmatpush.msra.mxu0 0.0
    %2127 = vmatpush.msra.mxu0 0.0
    %2128 = vmatpush.msra.mxu0 0.0
    %2129 = vmatpush.msra.mxu0 0.0
    %2130 = vmatpush.msra.mxu0 %v2110
    %2131 = vmatpush.msra.mxu0 %v2108
    %2132 = vmatpush.msra.mxu0 %v2106
    %2133 = vmatpush.msra.mxu0 %v2104
    %2134 = vmatmul.f32.gmra.mxu0 %v2116
    %v2135 = vpop.f32.mrf.mxu0
    %v2136 = vadd.f32 %v2098, %v2135
    %2137 = vdwg.mxu0
    %vm2138 = vcmask 25600
    %v2139 = vsel %vm2138, %v2136, -inf
    %2140 = vmax.xlane.f32.xlu0 %v2139
    %v2141 = vpop.xlane.xlu0 %2140
    %v2142 = vsub.f32 %v2136, %v2141
    %v2143 = vmul.f32 %v2142, 1.442695
    %v2144 = vpow.pop %v2143
    %v2145 = vsel %vm2138, %v2144, 0.0
    %2146 = vadd.xlane.f32.xlu0 %v2145
    %v2147 = vpop.xlane.xlu0 %2146
    %v2148 = vlog2.pop %v2147
    %v2149 = vmul.f32 %v2148, 0.6931472
    %v2150 = vsub.f32 %v2142, %v2149
    %2151 = vst.msk [vmem:[#allocation10] sm:$0x3] %vm2138, %v2150
    // Predicated region
    $region50: #{tpu_custom_call.1} parent=1 // pred_check
      _
    $region51: #{tpu_custom_call.1} parent=1 // pred_check_branch
      %2153 = sbr.rel (0) target = $region53
    $region52: #{tpu_custom_call.1} parent=1 // pred_region
      %2155 = vsyncadd [#allocation4], 0
      %s2157 = sshll.u32 [#allocation10], 4
      %s2158 = int_to_ptr.vmem [resolvable:$true] %s2157
      %s2159 = sshll.u32 %s8, 4
      %s2160 = int_to_ptr.hbm [resolvable:$true] %s2159
      %2162 = dma.vmem_to_hbm [thread:$0]  %s2158, 32, %s2160, [#allocation4]
    $region53: #{tpu_custom_call.1} parent=1 // pred_fallthru
      _
    // Predicated region
    $region54: #{tpu_custom_call.1} parent=1 // pred_check
      _
    $region55: #{tpu_custom_call.1} parent=1 // pred_check_branch
      %2164 = sbr.rel (0) target = $region57
    $region56: #{tpu_custom_call.1} parent=1 // pred_region
      %2166 = dma.done [#allocation4], 32
    $region57: #{tpu_custom_call.1} parent=1 // pred_fallthru
      _
    %2167 = vsyncpa [#allocation3], 1
    %2168 = vsyncpa [#allocation6], 1
    %2169 = vsyncpa [#allocation9], 1
    %2170 = vsyncpa [#allocation4], 1

</llo_original>
